<compile_context>
chip_gen: v6e
topology: v6e:2x2x1
jax: 0.10.0
libtpu: 0.0.40
codegen_flags: <defaults>
</compile_context>

<pallas_src>
import functools

import numpy as np
import jax
import jax.numpy as jnp
from jax.experimental import pallas as pl
from jax.experimental.pallas import tpu as pltpu


def _sge_kernel(local_ref, rawg_ref, w_ref, rowp_ref, bnl_ref, out_ref, *, lamda):
    """One batch tile (TB batch elements) per grid step."""
    tb, nr, d = local_ref.shape
    local = local_ref[...]                       # (TB, R, D) float32
    mm_dtype = w_ref.dtype                       # matmul input dtype (f32 or bf16)

    # ---- embedding_local: Linear (bias + BN folded into a per-(r,d) affine) -> Tanh ----
    l_lin = jnp.dot(local.reshape(tb * nr, d).astype(mm_dtype), w_ref[0],
                    preferred_element_type=jnp.float32).reshape(tb, nr, d)
    l_emb = jnp.tanh(l_lin * bnl_ref[0:1] + bnl_ref[1:2])                 # (TB, R, D)

    # ---- embedding_global: Linear (BN folded into weight/bias) -> Tanh ----
    g_lin = jnp.dot(rawg_ref[...].astype(mm_dtype), w_ref[1],
                    preferred_element_type=jnp.float32) + rowp_ref[0:1, :]
    g_emb = jnp.tanh(g_lin)                                               # (TB, D)

    # ---- common = l_emb * g_emb ; region weights = softmax_R(common . wc) ----
    # Linear(D, 1) done as a lane reduction instead of an N=1 MXU matmul.
    # (embedding_common's scalar bias cancels in the softmax over regions.)
    common = l_emb * g_emb[:, None, :]                                    # (TB, R, D)
    wc = rowp_ref[1:2, :]                                                 # (1, D)
    w_lin = jnp.sum(common * wc[None, :, :], axis=-1, keepdims=True)      # (TB, R, 1)
    w_max = jnp.max(w_lin, axis=1, keepdims=True)
    w_exp = jnp.exp(w_lin - w_max)
    weights = w_exp * pl.reciprocal(jnp.sum(w_exp, axis=1, keepdims=True),
                                    approx=True)                          # (TB, R, 1)

    # ---- new_global = l2norm( sum_r weights[r] * local[r] ) ----
    new_global = jnp.sum(weights * local, axis=1, keepdims=True)          # (TB, 1, D)
    g_norm = jnp.sqrt(jnp.sum(new_global * new_global, axis=-1, keepdims=True)) + 1e-8
    clip_emb = new_global / g_norm        # exact divide: error here is amplified by lamda

    # ---- region_attention ----
    attn = jnp.sum(local * clip_emb, axis=-1, keepdims=True) * lamda      # (TB, R, 1)
    a_max = jnp.max(attn, axis=1, keepdims=True)
    a_exp = jnp.exp(attn - a_max)
    a_sm = a_exp * pl.reciprocal(jnp.sum(a_exp, axis=1, keepdims=True), approx=True)
    a_norm = jnp.sqrt(jnp.sum(a_sm * a_sm, axis=1, keepdims=True)) + 1e-8
    a_l2 = a_sm * pl.reciprocal(a_norm, approx=True)                      # (TB, R, 1)

    out_ref[...] = local + a_l2 * clip_emb                                # (TB, R, D)


def _fold_params(params, bn_eps, matmul_dtype):
    """Eval-mode BN folding + packing into 3 kernel operands (one-time, wrapper-side)."""
    (wl, bl, bnlw, bnlb, bnlm, bnlv,
     wg, bg, bngw, bngb, bngm, bngv, wc, _bc) = params
    D = wl.shape[0]
    R = bnlw.shape[0]

    # bn_global (per-D affine) folds into the global Linear.
    s_g = bngw[0] * jax.lax.rsqrt(bngv[0] + bn_eps)               # (D,)
    wg_f = wg * s_g[None, :]                                      # scale output columns
    bg_f = (bg[0] - bngm[0]) * s_g + bngb[0]                      # (D,)

    # bn_local (per-R affine) + the local Linear bias fold into one (R, D) affine.
    s_r = bnlw[:, 0] * jax.lax.rsqrt(bnlv[:, 0] + bn_eps)         # (R,)
    t_r = bnlb[:, 0] - bnlm[:, 0] * s_r                           # (R,)
    scale_rd = jnp.broadcast_to(s_r[:, None], (R, D))
    shift_rd = bl[0][None, :] * s_r[:, None] + t_r[:, None]       # (R, D)

    w_stack = jnp.stack([wl, wg_f]).astype(matmul_dtype)              # (2, D, D)
    row_params = jnp.stack([bg_f, wc[:, 0]]).astype(jnp.float32)      # (2, D): [bg', wc row]
    bn_affine = jnp.stack([scale_rd, shift_rd]).astype(jnp.float32)   # (2, R, D)
    # NOTE: _bc (embedding_common bias) is deliberately not passed: it is constant
    # across regions and cancels in the softmax over regions.
    return w_stack, row_params, bn_affine


def _choose_batch_tile(B, R, D):
    """Pick TB (batch elements per grid step).

    Strategy: take the LARGEST batch tile such that
      (a) the per-step (TB, R, D) local/out block stays <= ~4 MiB, so the
          double-buffered in+out tiles (~16 MiB) fit the raised VMEM limit on
          v5e/v6e/v7x with room for the single-buffered parameters,
      (b) TB is a multiple of 8 (sublane-aligned (TB, D) raw_global block) or
          the whole batch,
      (c) at least 2 grid steps remain when B allows it, so the 'parallel'
          batch axis can be split across v7x's two TensorCores.
    Bigger tiles amortize the ~0.35 us per-grid-step overhead and give large
    lane/sublane-dense DMA blocks (HBM-BW bound regime at realistic D).
    """
    max_rows = max(R, min(2048, (4 << 20) // max(1, 4 * D)))
    divisors = [t for t in range(1, B + 1) if B % t == 0]
    fits = [t for t in divisors if t * R <= max_rows] or [1]
    aligned = [t for t in fits if t % 8 == 0 or t == B]
    cand = aligned or fits                      # rare fallback: unaligned divisor
    multi = [t for t in cand if B // t >= 2]
    if multi:
        return max(multi)
    return max(cand)                            # tiny problems: whole batch in one tile


def sge_forward(local, raw_global, params, *, attention_lamda, bn_eps=1e-5,
                matmul_dtype=jnp.float32, batch_tile=None):
    """SGE forward (eval mode).

    matmul_dtype: jnp.float32 (default; faithful to the PyTorch module) or
      jnp.bfloat16 (MXU-native on v5e/v6e/v7x). bf16 only feeds the two matmuls;
      accumulation and all elementwise/EUP math stay float32 (v5e-safe).
    """
    B, R, D = local.shape
    tb = int(batch_tile) if batch_tile is not None else _choose_batch_tile(B, R, D)
    assert B % tb == 0, (B, tb)

    w_stack, row_params, bn_affine = _fold_params(params, bn_eps, matmul_dtype)
    kern = functools.partial(_sge_kernel, lamda=float(attention_lamda))

    # Advisory cost hint for XLA's scheduler around the custom call.
    try:
        itemsize = jnp.dtype(matmul_dtype).itemsize
        cost = pl.CostEstimate(
            flops=int(2 * B * (R + 1) * D * D + 14 * B * R * D),
            transcendentals=int(B * (R + 1) * D + 4 * B * R),
            bytes_accessed=int(4 * (2 * B * R * D + B * D + 2 * R * D + 2 * D)
                               + itemsize * 2 * D * D),
        )
    except Exception:
        cost = None

    compiler_params = pltpu.CompilerParams(
        dimension_semantics=("parallel",),
        # Raise scoped VMEM so the larger batch tiles fit on v5e (16 MiB
        # default) while staying well under v7x's 64 MiB physical VMEM.
        vmem_limit_bytes=48 * 1024 * 1024,
    )

    def build(single_buffer_consts):
        def const_spec(shape):
            zeros = (0,) * len(shape)
            if single_buffer_consts:
                # Constant block index across the grid -> no need to double-buffer.
                return pl.BlockSpec(shape, lambda i: zeros,
                                    pipeline_mode=pl.Buffered(1))
            return pl.BlockSpec(shape, lambda i: zeros)

        in_specs = [
            pl.BlockSpec((tb, R, D), lambda i: (i, 0, 0)),   # local (batch-tiled)
            pl.BlockSpec((tb, D), lambda i: (i, 0)),         # raw_global (batch-tiled)
            const_spec((2, D, D)),                           # [W_local, W_global'] (BN folded)
            const_spec((2, D)),                              # [b_global', wc row]
            const_spec((2, R, D)),                           # bn_local scale / shift (+ b_local)
        ]
        # For D < 128 (toy sizes) output stores are lane-masked; realistic
        # embed_dim (>=128) makes the (TB, R, D) block lane-dense as-is.
        out_spec = pl.BlockSpec((tb, R, D), lambda i: (i, 0, 0))
        return pl.pallas_call(
            kern,
            out_shape=jax.ShapeDtypeStruct((B, R, D), jnp.float32),
            grid=(B // tb,),
            in_specs=in_specs,
            out_specs=out_spec,
            compiler_params=compiler_params,
            cost_estimate=cost,
        )

    args = (local, raw_global, w_stack, row_params, bn_affine)
    try:
        # Preferred: single-buffer the constant-index parameter operands.
        return jax.block_until_ready(build(True)(*args))
    except Exception:
        # pl.Buffered(1) not supported by this JAX/Mosaic build -> fall back to
        # default double-buffered constant operands (correctness unaffected).
        return jax.block_until_ready(build(False)(*args))


def init_params(key, embed_dim, num_region):
    """Deterministic init mirroring SGE.init_weights() (synthetic, no checkpoint)."""
    D, R = embed_dim, num_region
    k1, k2, k3 = jax.random.split(key, 3)
    r_lin = np.sqrt(6.0) / np.sqrt(D + D)
    r_com = np.sqrt(6.0) / np.sqrt(D + 1)
    wl = jax.random.uniform(k1, (D, D), jnp.float32, -r_lin, r_lin)   # (in, out)
    bl = jnp.zeros((1, D), jnp.float32)
    wg = jax.random.uniform(k2, (D, D), jnp.float32, -r_lin, r_lin)
    bg = jnp.zeros((1, D), jnp.float32)
    wc = jax.random.uniform(k3, (D, 1), jnp.float32, -r_com, r_com)
    bc = jnp.zeros((1, 1), jnp.float32)
    # BatchNorm1d(num_region): weight=1, bias=0, running_mean=0, running_var=1
    bnlw = jnp.ones((R, 1), jnp.float32)
    bnlb = jnp.zeros((R, 1), jnp.float32)
    bnlm = jnp.zeros((R, 1), jnp.float32)
    bnlv = jnp.ones((R, 1), jnp.float32)
    # BatchNorm1d(embed_dim)
    bngw = jnp.ones((1, D), jnp.float32)
    bngb = jnp.zeros((1, D), jnp.float32)
    bngm = jnp.zeros((1, D), jnp.float32)
    bngv = jnp.ones((1, D), jnp.float32)
    return (wl, bl, bnlw, bnlb, bnlm, bnlv,
            wg, bg, bngw, bngb, bngm, bngv, wc, bc)


def sge_reference(local, raw_global, params, attention_lamda, bn_eps=1e-5):
    """Plain-JAX reference of the PyTorch forward (eval mode)."""
    (wl, bl, bnlw, bnlb, bnlm, bnlv,
     wg, bg, bngw, bngb, bngm, bngv, wc, bc) = params
    l_lin = local @ wl + bl[0]
    l_bn = (l_lin - bnlm[:, 0][None, :, None]) / jnp.sqrt(bnlv[:, 0][None, :, None] + bn_eps) \
           * bnlw[:, 0][None, :, None] + bnlb[:, 0][None, :, None]
    l_emb = jnp.tanh(l_bn)
    g_lin = raw_global @ wg + bg[0]
    g_bn = (g_lin - bngm[0]) / jnp.sqrt(bngv[0] + bn_eps) * bngw[0] + bngb[0]
    g_emb = jnp.tanh(g_bn)
    common = l_emb * g_emb[:, None, :]
    w = (common @ wc)[..., 0] + bc[0, 0]
    w = jax.nn.softmax(w, axis=1)
    new_global = jnp.sum(w[..., None] * local, axis=1)
    new_global = new_global / (jnp.sqrt(jnp.sum(new_global ** 2, -1, keepdims=True)) + 1e-8)
    attn = jnp.einsum('bd,brd->br', new_global, local) * attention_lamda
    a = jax.nn.softmax(attn, axis=1)
    a = a / (jnp.sqrt(jnp.sum(a ** 2, -1, keepdims=True)) + 1e-8)
    return local + a[..., None] * new_global[:, None, :]


if __name__ == "__main__":
    # Small but representative: exercises a multi-step batch-tiled grid
    # (TB=8 -> 2 grid steps) and a lane-dense D=128 output block.
    B, R, D = 16, 8, 128                # batch, num_region, embed_dim
    attention_lamda = 9.0               # opt.attention_lamda (hyperparameter)

    key = jax.random.PRNGKey(0)
    k_loc, k_glob, k_par = jax.random.split(key, 3)
    local = jax.random.normal(k_loc, (B, R, D), jnp.float32)
    raw_global = jax.random.normal(k_glob, (B, D), jnp.float32)
    params = init_params(k_par, D, R)

    ref = jax.block_until_ready(sge_reference(local, raw_global, params, attention_lamda))

    # Default f32-matmul path: strict check against the PyTorch-faithful reference.
    out = jax.block_until_ready(
        sge_forward(local, raw_global, params, attention_lamda=attention_lamda))
    assert out.shape == (B, R, D), out.shape
    max_err = float(jnp.max(jnp.abs(out - ref)))
    assert max_err < 1e-2, f"mismatch vs reference: {max_err}"

    # bf16 MXU-input variant (v5e/v6e/v7x recommendation): bf16 feeds only the
    # two matmuls; accumulation and all elementwise math stay f32. Loose bound:
    # the bf16 input rounding is amplified by attention_lamda through two
    # softmaxes; the f32 run above is the strict correctness check.
    out_bf16 = jax.block_until_ready(
        sge_forward(local, raw_global, params, attention_lamda=attention_lamda,
                    matmul_dtype=jnp.bfloat16))
    max_err_bf16 = float(jnp.max(jnp.abs(out_bf16 - ref)))
    assert max_err_bf16 < 1e-1, f"bf16-matmul mismatch vs reference: {max_err_bf16}"

    print("KERNEL_OK")
</pallas_src>

<mosaic_0001>
module attributes {stable_mosaic.version = 11 : i64} {
  func.func @_sge_kernel(%arg0: i32, %arg1: memref<8x8x128xf32, #tpu.memory_space<vmem>>, %arg2: memref<8x128xf32, #tpu.memory_space<vmem>>, %arg3: memref<2x128x128xf32, #tpu.memory_space<vmem>>, %arg4: memref<2x128xf32, #tpu.memory_space<vmem>>, %arg5: memref<2x8x128xf32, #tpu.memory_space<vmem>>, %arg6: memref<8x8x128xf32, #tpu.memory_space<vmem>>) attributes {dimension_semantics = [#tpu.dimension_semantics<parallel>], iteration_bounds = array<i64: 2>, scalar_prefetch = 0 : i64, scratch_operands = 0 : i64, tpu.core_type = #tpu.core_type<tc>, window_params = [{transform_indices = @transform_0, window_bounds = array<i64: 8, 8, 128>}, {transform_indices = @transform_1, window_bounds = array<i64: 8, 128>}, {pipeline_mode = #tpu.pipeline_mode<synchronous>, transform_indices = @transform_2, window_bounds = array<i64: 2, 128, 128>}, {pipeline_mode = #tpu.pipeline_mode<synchronous>, transform_indices = @transform_3, window_bounds = array<i64: 2, 128>}, {pipeline_mode = #tpu.pipeline_mode<synchronous>, transform_indices = @transform_4, window_bounds = array<i64: 2, 8, 128>}, {transform_indices = @transform_5, window_bounds = array<i64: 8, 8, 128>}]} {
    %c0 = arith.constant 0 : index
    %c0_0 = arith.constant 0 : index
    %c0_1 = arith.constant 0 : index
    %0 = vector.load %arg1[%c0, %c0_0, %c0_1] : memref<8x8x128xf32, #tpu.memory_space<vmem>>, vector<8x8x128xf32>
    %1 = vector.shape_cast %0 : vector<8x8x128xf32> to vector<64x128xf32>
    %c0_2 = arith.constant 0 : index
    %c0_3 = arith.constant 0 : index
    %c0_4 = arith.constant 0 : index
    %2 = vector.load %arg3[%c0_2, %c0_3, %c0_4] : memref<2x128x128xf32, #tpu.memory_space<vmem>>, vector<1x128x128xf32>
    %3 = vector.shape_cast %2 : vector<1x128x128xf32> to vector<128x128xf32>
    %cst = arith.constant dense<0.000000e+00> : vector<64x128xf32>
    %4 = tpu.matmul %1, %3, %cst {dimension_numbers = #tpu.dot_dimension_numbers<[1], [0], [0], [1], [0, 0, 1, 1], [], []>} : vector<64x128xf32>, vector<128x128xf32>, vector<64x128xf32> -> vector<64x128xf32>
    %5 = vector.shape_cast %4 : vector<64x128xf32> to vector<8x8x128xf32>
    %c0_5 = arith.constant 0 : index
    %c0_6 = arith.constant 0 : index
    %c0_7 = arith.constant 0 : index
    %6 = vector.load %arg5[%c0_5, %c0_6, %c0_7] : memref<2x8x128xf32, #tpu.memory_space<vmem>>, vector<1x8x128xf32>
    %7 = vector.broadcast %6 : vector<1x8x128xf32> to vector<8x8x128xf32>
    %8 = arith.mulf %5, %7 : vector<8x8x128xf32>
    %c1 = arith.constant 1 : index
    %c0_8 = arith.constant 0 : index
    %c0_9 = arith.constant 0 : index
    %9 = vector.load %arg5[%c1, %c0_8, %c0_9] : memref<2x8x128xf32, #tpu.memory_space<vmem>>, vector<1x8x128xf32>
    %10 = vector.broadcast %9 : vector<1x8x128xf32> to vector<8x8x128xf32>
    %11 = arith.addf %8, %10 : vector<8x8x128xf32>
    %12 = math.tanh %11 : vector<8x8x128xf32>
    %c0_10 = arith.constant 0 : index
    %c0_11 = arith.constant 0 : index
    %13 = vector.load %arg2[%c0_10, %c0_11] : memref<8x128xf32, #tpu.memory_space<vmem>>, vector<8x128xf32>
    %c1_12 = arith.constant 1 : index
    %c0_13 = arith.constant 0 : index
    %c0_14 = arith.constant 0 : index
    %14 = vector.load %arg3[%c1_12, %c0_13, %c0_14] : memref<2x128x128xf32, #tpu.memory_space<vmem>>, vector<1x128x128xf32>
    %15 = vector.shape_cast %14 : vector<1x128x128xf32> to vector<128x128xf32>
    %cst_15 = arith.constant dense<0.000000e+00> : vector<8x128xf32>
    %16 = tpu.matmul %13, %15, %cst_15 {dimension_numbers = #tpu.dot_dimension_numbers<[1], [0], [0], [1], [0, 0, 1, 1], [], []>} : vector<8x128xf32>, vector<128x128xf32>, vector<8x128xf32> -> vector<8x128xf32>
    %c0_16 = arith.constant 0 : index
    %c0_17 = arith.constant 0 : index
    %17 = vector.load %arg4[%c0_16, %c0_17] : memref<2x128xf32, #tpu.memory_space<vmem>>, vector<1x128xf32>
    %18 = vector.broadcast %17 : vector<1x128xf32> to vector<8x128xf32>
    %19 = arith.addf %16, %18 : vector<8x128xf32>
    %20 = math.tanh %19 : vector<8x128xf32>
    %21 = vector.shape_cast %20 : vector<8x128xf32> to vector<8x1x128xf32>
    %22 = vector.broadcast %21 : vector<8x1x128xf32> to vector<8x8x128xf32>
    %23 = arith.mulf %12, %22 : vector<8x8x128xf32>
    %c1_18 = arith.constant 1 : index
    %c0_19 = arith.constant 0 : index
    %24 = vector.load %arg4[%c1_18, %c0_19] : memref<2x128xf32, #tpu.memory_space<vmem>>, vector<1x128xf32>
    %25 = vector.shape_cast %24 : vector<1x128xf32> to vector<1x1x128xf32>
    %26 = vector.broadcast %25 : vector<1x1x128xf32> to vector<8x8x128xf32>
    %27 = arith.mulf %23, %26 : vector<8x8x128xf32>
    %cst_20 = arith.constant dense<0.000000e+00> : vector<8x8xf32>
    %28 = vector.multi_reduction <add>, %27, %cst_20 [2] : vector<8x8x128xf32> to vector<8x8xf32>
    %29 = vector.shape_cast %28 : vector<8x8xf32> to vector<8x8x1xf32>
    %cst_21 = arith.constant dense<0xFF800000> : vector<8x1xf32>
    %30 = vector.multi_reduction <maximumf>, %29, %cst_21 [1] : vector<8x8x1xf32> to vector<8x1xf32>
    %31 = vector.shape_cast %30 : vector<8x1xf32> to vector<8x1x1xf32>
    %32 = vector.broadcast %31 : vector<8x1x1xf32> to vector<8x8x1xf32>
    %33 = arith.subf %29, %32 : vector<8x8x1xf32>
    %34 = math.exp %33 : vector<8x8x1xf32>
    %cst_22 = arith.constant dense<0.000000e+00> : vector<8x1xf32>
    %35 = vector.multi_reduction <add>, %34, %cst_22 [1] : vector<8x8x1xf32> to vector<8x1xf32>
    %36 = vector.shape_cast %35 : vector<8x1xf32> to vector<8x1x1xf32>
    %37 = tpu.reciprocal %36 {approx = true} : vector<8x1x1xf32> -> vector<8x1x1xf32>
    %38 = vector.broadcast %37 : vector<8x1x1xf32> to vector<8x8x1xf32>
    %39 = arith.mulf %34, %38 : vector<8x8x1xf32>
    %40 = vector.broadcast %39 : vector<8x8x1xf32> to vector<8x8x128xf32>
    %41 = arith.mulf %40, %0 : vector<8x8x128xf32>
    %cst_23 = arith.constant dense<0.000000e+00> : vector<8x128xf32>
    %42 = vector.multi_reduction <add>, %41, %cst_23 [1] : vector<8x8x128xf32> to vector<8x128xf32>
    %43 = vector.shape_cast %42 : vector<8x128xf32> to vector<8x1x128xf32>
    %44 = arith.mulf %43, %43 : vector<8x1x128xf32>
    %cst_24 = arith.constant dense<0.000000e+00> : vector<8x1xf32>
    %45 = vector.multi_reduction <add>, %44, %cst_24 [2] : vector<8x1x128xf32> to vector<8x1xf32>
    %46 = vector.shape_cast %45 : vector<8x1xf32> to vector<8x1x1xf32>
    %47 = math.sqrt %46 : vector<8x1x1xf32>
    %cst_25 = arith.constant 9.99999993E-9 : f32
    %48 = vector.broadcast %cst_25 : f32 to vector<8x1x1xf32>
    %49 = arith.addf %47, %48 : vector<8x1x1xf32>
    %50 = vector.broadcast %49 : vector<8x1x1xf32> to vector<8x1x128xf32>
    %51 = arith.divf %43, %50 : vector<8x1x128xf32>
    %52 = vector.broadcast %51 : vector<8x1x128xf32> to vector<8x8x128xf32>
    %53 = arith.mulf %0, %52 : vector<8x8x128xf32>
    %cst_26 = arith.constant dense<0.000000e+00> : vector<8x8xf32>
    %54 = vector.multi_reduction <add>, %53, %cst_26 [2] : vector<8x8x128xf32> to vector<8x8xf32>
    %55 = vector.shape_cast %54 : vector<8x8xf32> to vector<8x8x1xf32>
    %cst_27 = arith.constant 9.000000e+00 : f32
    %56 = vector.broadcast %cst_27 : f32 to vector<8x8x1xf32>
    %57 = arith.mulf %55, %56 : vector<8x8x1xf32>
    %cst_28 = arith.constant dense<0xFF800000> : vector<8x1xf32>
    %58 = vector.multi_reduction <maximumf>, %57, %cst_28 [1] : vector<8x8x1xf32> to vector<8x1xf32>
    %59 = vector.shape_cast %58 : vector<8x1xf32> to vector<8x1x1xf32>
    %60 = vector.broadcast %59 : vector<8x1x1xf32> to vector<8x8x1xf32>
    %61 = arith.subf %57, %60 : vector<8x8x1xf32>
    %62 = math.exp %61 : vector<8x8x1xf32>
    %cst_29 = arith.constant dense<0.000000e+00> : vector<8x1xf32>
    %63 = vector.multi_reduction <add>, %62, %cst_29 [1] : vector<8x8x1xf32> to vector<8x1xf32>
    %64 = vector.shape_cast %63 : vector<8x1xf32> to vector<8x1x1xf32>
    %65 = tpu.reciprocal %64 {approx = true} : vector<8x1x1xf32> -> vector<8x1x1xf32>
    %66 = vector.broadcast %65 : vector<8x1x1xf32> to vector<8x8x1xf32>
    %67 = arith.mulf %62, %66 : vector<8x8x1xf32>
    %68 = arith.mulf %67, %67 : vector<8x8x1xf32>
    %cst_30 = arith.constant dense<0.000000e+00> : vector<8x1xf32>
    %69 = vector.multi_reduction <add>, %68, %cst_30 [1] : vector<8x8x1xf32> to vector<8x1xf32>
    %70 = vector.shape_cast %69 : vector<8x1xf32> to vector<8x1x1xf32>
    %71 = math.sqrt %70 : vector<8x1x1xf32>
    %cst_31 = arith.constant 9.99999993E-9 : f32
    %72 = vector.broadcast %cst_31 : f32 to vector<8x1x1xf32>
    %73 = arith.addf %71, %72 : vector<8x1x1xf32>
    %74 = tpu.reciprocal %73 {approx = true} : vector<8x1x1xf32> -> vector<8x1x1xf32>
    %75 = vector.broadcast %74 : vector<8x1x1xf32> to vector<8x8x1xf32>
    %76 = arith.mulf %67, %75 : vector<8x8x1xf32>
    %77 = vector.broadcast %76 : vector<8x8x1xf32> to vector<8x8x128xf32>
    %78 = vector.broadcast %51 : vector<8x1x128xf32> to vector<8x8x128xf32>
    %79 = arith.mulf %77, %78 : vector<8x8x128xf32>
    %80 = arith.addf %0, %79 : vector<8x8x128xf32>
    %c0_32 = arith.constant 0 : index
    %c0_33 = arith.constant 0 : index
    %c0_34 = arith.constant 0 : index
    %81 = vector.load %arg6[%c0_32, %c0_33, %c0_34] : memref<8x8x128xf32, #tpu.memory_space<vmem>>, vector<8x8x128xf32>
    tpu.vector_store %arg6[%c0_32, %c0_33, %c0_34], %80 {strides = array<i32>} : memref<8x8x128xf32, #tpu.memory_space<vmem>>, vector<8x8x128xf32>,
    return
  }
  func.func @transform_0(%arg0: i32) -> (i32, i32, i32) {
    %c0_i32 = arith.constant 0 : i32
    %c0_i32_0 = arith.constant 0 : i32
    %c0_i32_1 = arith.constant 0 : i32
    return %arg0, %c0_i32, %c0_i32_0 : i32, i32, i32
  }
  func.func @transform_1(%arg0: i32) -> (i32, i32) {
    %c0_i32 = arith.constant 0 : i32
    %c0_i32_0 = arith.constant 0 : i32
    return %arg0, %c0_i32 : i32, i32
  }
  func.func @transform_2(%arg0: i32) -> (i32, i32, i32) {
    %c0_i32 = arith.constant 0 : i32
    %c0_i32_0 = arith.constant 0 : i32
    %c0_i32_1 = arith.constant 0 : i32
    %c0_i32_2 = arith.constant 0 : i32
    return %c0_i32, %c0_i32_0, %c0_i32_1 : i32, i32, i32
  }
  func.func @transform_3(%arg0: i32) -> (i32, i32) {
    %c0_i32 = arith.constant 0 : i32
    %c0_i32_0 = arith.constant 0 : i32
    %c0_i32_1 = arith.constant 0 : i32
    return %c0_i32, %c0_i32_0 : i32, i32
  }
  func.func @transform_4(%arg0: i32) -> (i32, i32, i32) {
    %c0_i32 = arith.constant 0 : i32
    %c0_i32_0 = arith.constant 0 : i32
    %c0_i32_1 = arith.constant 0 : i32
    %c0_i32_2 = arith.constant 0 : i32
    return %c0_i32, %c0_i32_0, %c0_i32_1 : i32, i32, i32
  }
  func.func @transform_5(%arg0: i32) -> (i32, i32, i32) {
    %c0_i32 = arith.constant 0 : i32
    %c0_i32_0 = arith.constant 0 : i32
    %c0_i32_1 = arith.constant 0 : i32
    return %arg0, %c0_i32, %c0_i32_0 : i32, i32, i32
  }
}

module attributes {stable_mosaic.version = 11 : i64} {
  func.func @_sge_kernel(%arg0: i32, %arg1: memref<8x8x128xf32, #tpu.memory_space<vmem>>, %arg2: memref<8x128xf32, #tpu.memory_space<vmem>>, %arg3: memref<2x128x128xf32, #tpu.memory_space<vmem>>, %arg4: memref<2x128xf32, #tpu.memory_space<vmem>>, %arg5: memref<2x8x128xf32, #tpu.memory_space<vmem>>, %arg6: memref<8x8x128xf32, #tpu.memory_space<vmem>>) attributes {dimension_semantics = [#tpu.dimension_semantics<parallel>], iteration_bounds = array<i64: 2>, scalar_prefetch = 0 : i64, scratch_operands = 0 : i64, tpu.core_type = #tpu.core_type<tc>, window_params = [{transform_indices = @transform_0, window_bounds = array<i64: 8, 8, 128>}, {transform_indices = @transform_1, window_bounds = array<i64: 8, 128>}, {pipeline_mode = #tpu.pipeline_mode<synchronous>, transform_indices = @transform_2, window_bounds = array<i64: 2, 128, 128>}, {pipeline_mode = #tpu.pipeline_mode<synchronous>, transform_indices = @transform_3, window_bounds = array<i64: 2, 128>}, {pipeline_mode = #tpu.pipeline_mode<synchronous>, transform_indices = @transform_4, window_bounds = array<i64: 2, 8, 128>}, {transform_indices = @transform_5, window_bounds = array<i64: 8, 8, 128>}]} {
    %c0 = arith.constant 0 : index
    %c0_0 = arith.constant 0 : index
    %c0_1 = arith.constant 0 : index
    %0 = vector.load %arg1[%c0, %c0_0, %c0_1] : memref<8x8x128xf32, #tpu.memory_space<vmem>>, vector<8x8x128xf32>
    %1 = vector.shape_cast %0 : vector<8x8x128xf32> to vector<64x128xf32>
    %c0_2 = arith.constant 0 : index
    %c0_3 = arith.constant 0 : index
    %c0_4 = arith.constant 0 : index
    %2 = vector.load %arg3[%c0_2, %c0_3, %c0_4] : memref<2x128x128xf32, #tpu.memory_space<vmem>>, vector<1x128x128xf32>
    %3 = vector.shape_cast %2 : vector<1x128x128xf32> to vector<128x128xf32>
    %cst = arith.constant dense<0.000000e+00> : vector<64x128xf32>
    %4 = tpu.matmul %1, %3, %cst {dimension_numbers = #tpu.dot_dimension_numbers<[1], [0], [0], [1], [0, 0, 1, 1], [], []>} : vector<64x128xf32>, vector<128x128xf32>, vector<64x128xf32> -> vector<64x128xf32>
    %5 = vector.shape_cast %4 : vector<64x128xf32> to vector<8x8x128xf32>
    %c0_5 = arith.constant 0 : index
    %c0_6 = arith.constant 0 : index
    %c0_7 = arith.constant 0 : index
    %6 = vector.load %arg5[%c0_5, %c0_6, %c0_7] : memref<2x8x128xf32, #tpu.memory_space<vmem>>, vector<1x8x128xf32>
    %7 = vector.broadcast %6 : vector<1x8x128xf32> to vector<8x8x128xf32>
    %8 = arith.mulf %5, %7 : vector<8x8x128xf32>
    %c1 = arith.constant 1 : index
    %c0_8 = arith.constant 0 : index
    %c0_9 = arith.constant 0 : index
    %9 = vector.load %arg5[%c1, %c0_8, %c0_9] : memref<2x8x128xf32, #tpu.memory_space<vmem>>, vector<1x8x128xf32>
    %10 = vector.broadcast %9 : vector<1x8x128xf32> to vector<8x8x128xf32>
    %11 = arith.addf %8, %10 : vector<8x8x128xf32>
    %12 = math.tanh %11 : vector<8x8x128xf32>
    %c0_10 = arith.constant 0 : index
    %c0_11 = arith.constant 0 : index
    %13 = vector.load %arg2[%c0_10, %c0_11] : memref<8x128xf32, #tpu.memory_space<vmem>>, vector<8x128xf32>
    %c1_12 = arith.constant 1 : index
    %c0_13 = arith.constant 0 : index
    %c0_14 = arith.constant 0 : index
    %14 = vector.load %arg3[%c1_12, %c0_13, %c0_14] : memref<2x128x128xf32, #tpu.memory_space<vmem>>, vector<1x128x128xf32>
    %15 = vector.shape_cast %14 : vector<1x128x128xf32> to vector<128x128xf32>
    %cst_15 = arith.constant dense<0.000000e+00> : vector<8x128xf32>
    %16 = tpu.matmul %13, %15, %cst_15 {dimension_numbers = #tpu.dot_dimension_numbers<[1], [0], [0], [1], [0, 0, 1, 1], [], []>} : vector<8x128xf32>, vector<128x128xf32>, vector<8x128xf32> -> vector<8x128xf32>
    %c0_16 = arith.constant 0 : index
    %c0_17 = arith.constant 0 : index
    %17 = vector.load %arg4[%c0_16, %c0_17] : memref<2x128xf32, #tpu.memory_space<vmem>>, vector<1x128xf32>
    %18 = vector.broadcast %17 : vector<1x128xf32> to vector<8x128xf32>
    %19 = arith.addf %16, %18 : vector<8x128xf32>
    %20 = math.tanh %19 : vector<8x128xf32>
    %21 = vector.shape_cast %20 : vector<8x128xf32> to vector<8x1x128xf32>
    %22 = vector.broadcast %21 : vector<8x1x128xf32> to vector<8x8x128xf32>
    %23 = arith.mulf %12, %22 : vector<8x8x128xf32>
    %c1_18 = arith.constant 1 : index
    %c0_19 = arith.constant 0 : index
    %24 = vector.load %arg4[%c1_18, %c0_19] : memref<2x128xf32, #tpu.memory_space<vmem>>, vector<1x128xf32>
    %25 = vector.shape_cast %24 : vector<1x128xf32> to vector<1x1x128xf32>
    %26 = vector.broadcast %25 : vector<1x1x128xf32> to vector<8x8x128xf32>
    %27 = arith.mulf %23, %26 : vector<8x8x128xf32>
    %cst_20 = arith.constant dense<0.000000e+00> : vector<8x8xf32>
    %28 = vector.multi_reduction <add>, %27, %cst_20 [2] : vector<8x8x128xf32> to vector<8x8xf32>
    %29 = vector.shape_cast %28 : vector<8x8xf32> to vector<8x8x1xf32>
    %cst_21 = arith.constant dense<0xFF800000> : vector<8x1xf32>
    %30 = vector.multi_reduction <maximumf>, %29, %cst_21 [1] : vector<8x8x1xf32> to vector<8x1xf32>
    %31 = vector.shape_cast %30 : vector<8x1xf32> to vector<8x1x1xf32>
    %32 = vector.broadcast %31 : vector<8x1x1xf32> to vector<8x8x1xf32>
    %33 = arith.subf %29, %32 : vector<8x8x1xf32>
    %34 = math.exp %33 : vector<8x8x1xf32>
    %cst_22 = arith.constant dense<0.000000e+00> : vector<8x1xf32>
    %35 = vector.multi_reduction <add>, %34, %cst_22 [1] : vector<8x8x1xf32> to vector<8x1xf32>
    %36 = vector.shape_cast %35 : vector<8x1xf32> to vector<8x1x1xf32>
    %37 = tpu.reciprocal %36 {approx = true} : vector<8x1x1xf32> -> vector<8x1x1xf32>
    %38 = vector.broadcast %37 : vector<8x1x1xf32> to vector<8x8x1xf32>
    %39 = arith.mulf %34, %38 : vector<8x8x1xf32>
    %40 = vector.broadcast %39 : vector<8x8x1xf32> to vector<8x8x128xf32>
    %41 = arith.mulf %40, %0 : vector<8x8x128xf32>
    %cst_23 = arith.constant dense<0.000000e+00> : vector<8x128xf32>
    %42 = vector.multi_reduction <add>, %41, %cst_23 [1] : vector<8x8x128xf32> to vector<8x128xf32>
    %43 = vector.shape_cast %42 : vector<8x128xf32> to vector<8x1x128xf32>
    %44 = arith.mulf %43, %43 : vector<8x1x128xf32>
    %cst_24 = arith.constant dense<0.000000e+00> : vector<8x1xf32>
    %45 = vector.multi_reduction <add>, %44, %cst_24 [2] : vector<8x1x128xf32> to vector<8x1xf32>
    %46 = vector.shape_cast %45 : vector<8x1xf32> to vector<8x1x1xf32>
    %47 = math.sqrt %46 : vector<8x1x1xf32>
    %cst_25 = arith.constant 9.99999993E-9 : f32
    %48 = vector.broadcast %cst_25 : f32 to vector<8x1x1xf32>
    %49 = arith.addf %47, %48 : vector<8x1x1xf32>
    %50 = vector.broadcast %49 : vector<8x1x1xf32> to vector<8x1x128xf32>
    %51 = arith.divf %43, %50 : vector<8x1x128xf32>
    %52 = vector.broadcast %51 : vector<8x1x128xf32> to vector<8x8x128xf32>
    %53 = arith.mulf %0, %52 : vector<8x8x128xf32>
    %cst_26 = arith.constant dense<0.000000e+00> : vector<8x8xf32>
    %54 = vector.multi_reduction <add>, %53, %cst_26 [2] : vector<8x8x128xf32> to vector<8x8xf32>
    %55 = vector.shape_cast %54 : vector<8x8xf32> to vector<8x8x1xf32>
    %cst_27 = arith.constant 9.000000e+00 : f32
    %56 = vector.broadcast %cst_27 : f32 to vector<8x8x1xf32>
    %57 = arith.mulf %55, %56 : vector<8x8x1xf32>
    %cst_28 = arith.constant dense<0xFF800000> : vector<8x1xf32>
    %58 = vector.multi_reduction <maximumf>, %57, %cst_28 [1] : vector<8x8x1xf32> to vector<8x1xf32>
    %59 = vector.shape_cast %58 : vector<8x1xf32> to vector<8x1x1xf32>
    %60 = vector.broadcast %59 : vector<8x1x1xf32> to vector<8x8x1xf32>
    %61 = arith.subf %57, %60 : vector<8x8x1xf32>
    %62 = math.exp %61 : vector<8x8x1xf32>
    %cst_29 = arith.constant dense<0.000000e+00> : vector<8x1xf32>
    %63 = vector.multi_reduction <add>, %62, %cst_29 [1] : vector<8x8x1xf32> to vector<8x1xf32>
    %64 = vector.shape_cast %63 : vector<8x1xf32> to vector<8x1x1xf32>
    %65 = tpu.reciprocal %64 {approx = true} : vector<8x1x1xf32> -> vector<8x1x1xf32>
    %66 = vector.broadcast %65 : vector<8x1x1xf32> to vector<8x8x1xf32>
    %67 = arith.mulf %62, %66 : vector<8x8x1xf32>
    %68 = arith.mulf %67, %67 : vector<8x8x1xf32>
    %cst_30 = arith.constant dense<0.000000e+00> : vector<8x1xf32>
    %69 = vector.multi_reduction <add>, %68, %cst_30 [1] : vector<8x8x1xf32> to vector<8x1xf32>
    %70 = vector.shape_cast %69 : vector<8x1xf32> to vector<8x1x1xf32>
    %71 = math.sqrt %70 : vector<8x1x1xf32>
    %cst_31 = arith.constant 9.99999993E-9 : f32
    %72 = vector.broadcast %cst_31 : f32 to vector<8x1x1xf32>
    %73 = arith.addf %71, %72 : vector<8x1x1xf32>
    %74 = tpu.reciprocal %73 {approx = true} : vector<8x1x1xf32> -> vector<8x1x1xf32>
    %75 = vector.broadcast %74 : vector<8x1x1xf32> to vector<8x8x1xf32>
    %76 = arith.mulf %67, %75 : vector<8x8x1xf32>
    %77 = vector.broadcast %76 : vector<8x8x1xf32> to vector<8x8x128xf32>
    %78 = vector.broadcast %51 : vector<8x1x128xf32> to vector<8x8x128xf32>
    %79 = arith.mulf %77, %78 : vector<8x8x128xf32>
    %80 = arith.addf %0, %79 : vector<8x8x128xf32>
    %c0_32 = arith.constant 0 : index
    %c0_33 = arith.constant 0 : index
    %c0_34 = arith.constant 0 : index
    %81 = vector.load %arg6[%c0_32, %c0_33, %c0_34] : memref<8x8x128xf32, #tpu.memory_space<vmem>>, vector<8x8x128xf32>
    tpu.vector_store %arg6[%c0_32, %c0_33, %c0_34], %80 {strides = array<i32>} : memref<8x8x128xf32, #tpu.memory_space<vmem>>, vector<8x8x128xf32>,
    return
  }
  func.func @transform_0(%arg0: i32) -> (i32, i32, i32) {
    %c0_i32 = arith.constant 0 : i32
    %c0_i32_0 = arith.constant 0 : i32
    %c0_i32_1 = arith.constant 0 : i32
    return %arg0, %c0_i32, %c0_i32_0 : i32, i32, i32
  }
  func.func @transform_1(%arg0: i32) -> (i32, i32) {
    %c0_i32 = arith.constant 0 : i32
    %c0_i32_0 = arith.constant 0 : i32
    return %arg0, %c0_i32 : i32, i32
  }
  func.func @transform_2(%arg0: i32) -> (i32, i32, i32) {
    %c0_i32 = arith.constant 0 : i32
    %c0_i32_0 = arith.constant 0 : i32
    %c0_i32_1 = arith.constant 0 : i32
    %c0_i32_2 = arith.constant 0 : i32
    return %c0_i32, %c0_i32_0, %c0_i32_1 : i32, i32, i32
  }
  func.func @transform_3(%arg0: i32) -> (i32, i32) {
    %c0_i32 = arith.constant 0 : i32
    %c0_i32_0 = arith.constant 0 : i32
    %c0_i32_1 = arith.constant 0 : i32
    return %c0_i32, %c0_i32_0 : i32, i32
  }
  func.func @transform_4(%arg0: i32) -> (i32, i32, i32) {
    %c0_i32 = arith.constant 0 : i32
    %c0_i32_0 = arith.constant 0 : i32
    %c0_i32_1 = arith.constant 0 : i32
    %c0_i32_2 = arith.constant 0 : i32
    return %c0_i32, %c0_i32_0, %c0_i32_1 : i32, i32, i32
  }
  func.func @transform_5(%arg0: i32) -> (i32, i32, i32) {
    %c0_i32 = arith.constant 0 : i32
    %c0_i32_0 = arith.constant 0 : i32
    %c0_i32_1 = arith.constant 0 : i32
    return %arg0, %c0_i32, %c0_i32_0 : i32, i32, i32
  }
}

</mosaic_0001>

<llo_original>
// kernel: tpu_custom_call.1
$region0: #{tpu_custom_call.1}
  #allocation0 [shape = 'u32[]', space=smem, size = 0x4, offset = 0x4, fixed_abs, tag = 'smem constant byte address 0x4 - core index']
  #allocation1 [shape = 'u32[144,128]{1,0:T(1,128)}', space=vmem, size = 0x12000, scoped, tag = 'internal scratch']
  %s0 = inlined_call_operand.hbm [shape: f32[16,8,128], index: 0, kind: input, shape index: {}]
  %s1 = inlined_call_operand.hbm [shape: f32[16,128], index: 1, kind: input, shape index: {}]
  %s2 = inlined_call_operand.hbm [shape: f32[2,128,128], index: 2, kind: input, shape index: {}]
  %s3 = inlined_call_operand.vmem [shape: f32[2,128], index: 3, kind: input, shape index: {}]
  %s4 = inlined_call_operand.hbm [shape: f32[2,8,128], index: 4, kind: input, shape index: {}]
  %s5 = inlined_call_operand.hbm [shape: f32[16,8,128], index: 5, kind: output, shape index: {}]
  %s6 = sld [smem:[#allocation0]]
  $region69: #{tpu_custom_call.1} parent=0
    _
  %s8 = ssub.s32 1, %s6
  %s9 = scalar_select 0, %s8, %s6
  $region1: #{tpu_custom_call.1} parent=0
    #allocation2 [shape = 'u8[65536]{0}', space=vmem, size = 0x10000, scoped, tag = 'input window, operand 0']
    #allocation3 [shape = 's32[2]{0}', space=sflag, size = 0x8, scoped, tag = 'scoped memory for tpu_custom_call.1']
    #allocation4 [shape = 's32[2]{0}', space=sflag, size = 0x8, scoped, tag = 'scoped memory for tpu_custom_call.1']
    #allocation5 [shape = 'u8[8192]{0}', space=vmem, size = 0x2000, scoped, tag = 'input window, operand 1']
    #allocation6 [shape = 's32[2]{0}', space=sflag, size = 0x8, scoped, tag = 'scoped memory for tpu_custom_call.1']
    #allocation7 [shape = 'u8[131072]{0}', space=vmem, size = 0x20000, scoped, tag = 'input window, operand 2, single buffered']
    #allocation8 [shape = 'u8[8192]{0}', space=vmem, size = 0x2000, scoped, tag = 'input window, operand 4, single buffered']
    #allocation9 [shape = 's32[1]{0}', space=sflag, size = 0x4, scoped, tag = 'scoped memory for tpu_custom_call.1']
    #allocation10 [shape = 'u8[65536]{0}', space=vmem, size = 0x10000, scoped, tag = 'output window, operand 0']
    %10 = vsyncpa [#allocation3], 0
    %s11 = scalar_lea.sflag [#allocation3], 1
    %12 = vsyncpa %s11, 0
    %13 = vsyncpa [#allocation6], 0
    %s14 = scalar_lea.sflag [#allocation6], 1
    %15 = vsyncpa %s14, 0
    %16 = vsyncpa [#allocation9], 0
    %17 = vsyncpa [#allocation4], 0
    %s18 = scalar_lea.sflag [#allocation4], 1
    %19 = vsyncpa %s18, 0
    loop: start=0, step=1, limit=4
    $region2: #{tpu_custom_call.1} parent=1 // loop_pre_header
      _
    $region3: #{tpu_custom_call.1} parent=1 // loop_header
      %s21 = sphi 0, %s25
      %p22 = scmp.ge.s32.totalorder %s21, 4
      %s31 = sphi 0, %s33
      %s34 = sphi 0, %s31
      %s35 = sphi 0, %s34
      %s51 = sphi 0, %s35
      %s57 = sphi 0, %s59
      %s60 = sphi 0, %s57
      %s61 = sphi 0, %s60
      %s77 = sphi 0, %s61
      %s81 = sphi 0, %s81
      %s83 = sphi 0, %s81
      %s84 = sphi 0, %s83
      %s98 = sphi 0, %s84
      %s102 = sphi 0, %s102
      %s104 = sphi 0, %s102
      %s105 = sphi 0, %s104
      %s119 = sphi 0, %s105
      %s123 = sphi 0, %s123
      %s125 = sphi 0, %s123
      %s126 = sphi 0, %s125
      %s140 = sphi 0, %s126
      %s146 = sphi 0, %s148
      %s149 = sphi 0, %s146
      %s150 = sphi 0, %s149
      %s166 = sphi 0, %s150
    $region4: #{tpu_custom_call.1} parent=1 // loop_header_branch
      %24 = sbr.rel (%p22) target = $region8
    $region5: #{tpu_custom_call.1} parent=1 // loop_body
      %s26 = ssub.s32 %s21, 1
      %s27 = ssub.s32 %s21, 2
      %s28 = sadd.s32 %s21, 1
      %s29 = ssub.s32 %s21, %s28
      %p30 = scmp.eq.s32.totalorder %s29, 0
      %s32 = sadd.s32 %s31, 1
      %s33 = scalar_select %p30, %s31, %s32
      %p36 = pneg %p30
      %p37 = scmp.eq.s32.totalorder %s21, 1
      %p38 = por %p36, %p37
      %p39 = scmp.ne.s32.totalorder %s31, %s34
      %p40 = scmp.eq.s32.totalorder %s21, 0
      %p41 = por %p39, %p40
      %p42 = scmp.ne.s32.totalorder %s31, %s34
      %p43 = scmp.eq.s32.totalorder %s26, 1
      %p44 = por %p42, %p43
      %p45 = scmp.ne.s32.totalorder %s34, %s35
      %p46 = scmp.eq.s32.totalorder %s26, 0
      %p47 = por %p45, %p46
      %p48 = scmp.ne.s32.totalorder %s34, %s35
      %p49 = scmp.eq.s32.totalorder %s27, 1
      %p50 = por %p48, %p49
      %p52 = scmp.ne.s32.totalorder %s35, %s51
      %p53 = scmp.eq.s32.totalorder %s27, 0
      %p54 = por %p52, %p53
      %s55 = ssub.s32 %s21, %s28
      %p56 = scmp.eq.s32.totalorder %s55, 0
      %s58 = sadd.s32 %s57, 1
      %s59 = scalar_select %p56, %s57, %s58
      %p62 = pneg %p56
      %p63 = scmp.eq.s32.totalorder %s21, 1
      %p64 = por %p62, %p63
      %p65 = scmp.ne.s32.totalorder %s57, %s60
      %p66 = scmp.eq.s32.totalorder %s21, 0
      %p67 = por %p65, %p66
      %p68 = scmp.ne.s32.totalorder %s57, %s60
      %p69 = scmp.eq.s32.totalorder %s26, 1
      %p70 = por %p68, %p69
      %p71 = scmp.ne.s32.totalorder %s60, %s61
      %p72 = scmp.eq.s32.totalorder %s26, 0
      %p73 = por %p71, %p72
      %p74 = scmp.ne.s32.totalorder %s60, %s61
      %p75 = scmp.eq.s32.totalorder %s27, 1
      %p76 = por %p74, %p75
      %p78 = scmp.ne.s32.totalorder %s61, %s77
      %p79 = scmp.eq.s32.totalorder %s27, 0
      %p80 = por %p78, %p79
      %s82 = sadd.s32 %s81, 1
      %p85 = scmp.eq.s32.totalorder %s21, 1
      %p86 = scmp.ne.s32.totalorder %s81, %s83
      %p87 = scmp.eq.s32.totalorder %s21, 0
      %p88 = por %p86, %p87
      %p89 = scmp.ne.s32.totalorder %s81, %s83
      %p90 = scmp.eq.s32.totalorder %s26, 1
      %p91 = por %p89, %p90
      %p92 = scmp.ne.s32.totalorder %s83, %s84
      %p93 = scmp.eq.s32.totalorder %s26, 0
      %p94 = por %p92, %p93
      %p95 = scmp.ne.s32.totalorder %s83, %s84
      %p96 = scmp.eq.s32.totalorder %s27, 1
      %p97 = por %p95, %p96
      %p99 = scmp.ne.s32.totalorder %s84, %s98
      %p100 = scmp.eq.s32.totalorder %s27, 0
      %p101 = por %p99, %p100
      %s103 = sadd.s32 %s102, 1
      %p106 = scmp.eq.s32.totalorder %s21, 1
      %p107 = scmp.ne.s32.totalorder %s102, %s104
      %p108 = scmp.eq.s32.totalorder %s21, 0
      %p109 = por %p107, %p108
      %p110 = scmp.ne.s32.totalorder %s102, %s104
      %p111 = scmp.eq.s32.totalorder %s26, 1
      %p112 = por %p110, %p111
      %p113 = scmp.ne.s32.totalorder %s104, %s105
      %p114 = scmp.eq.s32.totalorder %s26, 0
      %p115 = por %p113, %p114
      %p116 = scmp.ne.s32.totalorder %s104, %s105
      %p117 = scmp.eq.s32.totalorder %s27, 1
      %p118 = por %p116, %p117
      %p120 = scmp.ne.s32.totalorder %s105, %s119
      %p121 = scmp.eq.s32.totalorder %s27, 0
      %p122 = por %p120, %p121
      %s124 = sadd.s32 %s123, 1
      %p127 = scmp.eq.s32.totalorder %s21, 1
      %p128 = scmp.ne.s32.totalorder %s123, %s125
      %p129 = scmp.eq.s32.totalorder %s21, 0
      %p130 = por %p128, %p129
      %p131 = scmp.ne.s32.totalorder %s123, %s125
      %p132 = scmp.eq.s32.totalorder %s26, 1
      %p133 = por %p131, %p132
      %p134 = scmp.ne.s32.totalorder %s125, %s126
      %p135 = scmp.eq.s32.totalorder %s26, 0
      %p136 = por %p134, %p135
      %p137 = scmp.ne.s32.totalorder %s125, %s126
      %p138 = scmp.eq.s32.totalorder %s27, 1
      %p139 = por %p137, %p138
      %p141 = scmp.ne.s32.totalorder %s126, %s140
      %p142 = scmp.eq.s32.totalorder %s27, 0
      %p143 = por %p141, %p142
      %s144 = ssub.s32 %s21, %s28
      %p145 = scmp.eq.s32.totalorder %s144, 0
      %s147 = sadd.s32 %s146, 1
      %s148 = scalar_select %p145, %s146, %s147
      %p151 = pneg %p145
      %p152 = scmp.eq.s32.totalorder %s21, 1
      %p153 = por %p151, %p152
      %p154 = scmp.ne.s32.totalorder %s146, %s149
      %p155 = scmp.eq.s32.totalorder %s21, 0
      %p156 = por %p154, %p155
      %p157 = scmp.ne.s32.totalorder %s146, %s149
      %p158 = scmp.eq.s32.totalorder %s26, 1
      %p159 = por %p157, %p158
      %p160 = scmp.ne.s32.totalorder %s149, %s150
      %p161 = scmp.eq.s32.totalorder %s26, 0
      %p162 = por %p160, %p161
      %p163 = scmp.ne.s32.totalorder %s149, %s150
      %p164 = scmp.eq.s32.totalorder %s27, 1
      %p165 = por %p163, %p164
      %p167 = scmp.ne.s32.totalorder %s150, %s166
      %p168 = scmp.eq.s32.totalorder %s27, 0
      %p169 = por %p167, %p168
      %p170 = scmp.le.s32.totalorder 1, %s21
      %p171 = scmp.lt.s32.totalorder %s21, 3
      %p172 = pnand %p170, %p171
      %p173 = pneg %p172
      // Predicated region
      $region9: #{tpu_custom_call.1} parent=5 // pred_check
        _
      $region10: #{tpu_custom_call.1} parent=5 // pred_check_branch
        %175 = sbr.rel (%p172) target = $region12
      $region11: #{tpu_custom_call.1} parent=5 // pred_region
        %s176 = ssub.s32 %s21, 1
        // Predicated region
        $region13: #{tpu_custom_call.1} parent=11 // pred_check
          %p177 = pneg %p94
        $region14: #{tpu_custom_call.1} parent=11 // pred_check_branch
          %179 = sbr.rel (%p177) target = $region16
        $region15: #{tpu_custom_call.1} parent=11 // pred_region
          %s181 = ssub.s32 4096, 4096
          %182 = vsyncadd [#allocation6], %s181
          %s183 = sshll.u32 [#allocation7], 4
          %s184 = int_to_ptr.vmem [resolvable:$true] %s183
          %189 = dma.hbm_to_vmem [thread:$0]  %s2, 4096, %s184, [#allocation6], 128, 128, 8
        $region16: #{tpu_custom_call.1} parent=11 // pred_fallthru
          _
        // Predicated region
        $region17: #{tpu_custom_call.1} parent=11 // pred_check
          %p190 = pneg %p115
        $region18: #{tpu_custom_call.1} parent=11 // pred_check_branch
          %192 = sbr.rel (%p190) target = $region20
        $region19: #{tpu_custom_call.1} parent=11 // pred_region
          _
        $region20: #{tpu_custom_call.1} parent=11 // pred_fallthru
          _
        // Predicated region
        $region21: #{tpu_custom_call.1} parent=11 // pred_check
          %p193 = pneg %p136
        $region22: #{tpu_custom_call.1} parent=11 // pred_check_branch
          %195 = sbr.rel (%p193) target = $region24
        $region23: #{tpu_custom_call.1} parent=11 // pred_region
          %s197 = ssub.s32 256, 256
          %198 = vsyncadd [#allocation9], %s197
          %s199 = sshll.u32 [#allocation8], 4
          %s200 = int_to_ptr.vmem [resolvable:$true] %s199
          %205 = dma.hbm_to_vmem [thread:$0]  %s4, 256, %s200, [#allocation9], 128, 128, 8
        $region24: #{tpu_custom_call.1} parent=11 // pred_fallthru
          _
      $region12: #{tpu_custom_call.1} parent=5 // pred_fallthru
        _
      %p206 = scmp.lt.s32.totalorder %s21, 2
      // Predicated region
      $region25: #{tpu_custom_call.1} parent=5 // pred_check
        %p207 = pneg %p206
      $region26: #{tpu_custom_call.1} parent=5 // pred_check_branch
        %209 = sbr.rel (%p207) target = $region28
      $region27: #{tpu_custom_call.1} parent=5 // pred_region
        // Predicated region
        $region29: #{tpu_custom_call.1} parent=27 // pred_check
          %p210 = pneg %p41
        $region30: #{tpu_custom_call.1} parent=27 // pred_check_branch
          %212 = sbr.rel (%p210) target = $region32
        $region31: #{tpu_custom_call.1} parent=27 // pred_region
          %s213 = sand.u32 %s31, 1
          %s214 = scalar_lea.sflag [#allocation3], %s213
          %s215 = sand.u32 %s31, 1
          %s216 = smul.addr %s215, 64
          %s217 = scalar_lea.vmem [#allocation2], %s216
          %s218 = smul.u32 8, %s21
          %s220 = ssub.s32 1024, 1024
          %221 = vsyncadd %s214, %s220
          %s222 = smul.addr %s218, 128
          %s223 = scalar_lea.hbm %s0, %s222
          %s224 = sshll.u32 %s217, 4
          %s225 = int_to_ptr.vmem [resolvable:$true] %s224
          %230 = dma.hbm_to_vmem [thread:$0]  %s223, 1024, %s225, %s214, 128, 128, 8
        $region32: #{tpu_custom_call.1} parent=27 // pred_fallthru
          _
        // Predicated region
        $region33: #{tpu_custom_call.1} parent=27 // pred_check
          %p231 = pneg %p67
        $region34: #{tpu_custom_call.1} parent=27 // pred_check_branch
          %233 = sbr.rel (%p231) target = $region36
        $region35: #{tpu_custom_call.1} parent=27 // pred_region
          %s234 = sand.u32 %s21, 1
          %s235 = scalar_lea.sflag [#allocation6], %s234
          %s236 = sand.u32 %s57, 1
          %s237 = smul.addr %s236, 8
          %s238 = scalar_lea.vmem [#allocation5], %s237
          %s240 = ssub.s32 128, 128
          %241 = vsyncadd %s235, %s240
          %s242 = smul.addr %s21, 128
          %s243 = scalar_lea.hbm %s1, %s242
          %s245 = sshll.u32 %s238, 4
          %s246 = int_to_ptr.vmem [resolvable:$true] %s245
          %248 = dma.hbm_to_vmem [thread:$0]  %s243, 128, %s246, %s235
        $region36: #{tpu_custom_call.1} parent=27 // pred_fallthru
          _
      $region28: #{tpu_custom_call.1} parent=5 // pred_fallthru
        _
      %p249 = scmp.le.s32.totalorder 1, %s21
      %p250 = scmp.lt.s32.totalorder %s21, 3
      %p251 = pnand %p249, %p250
      %p252 = pneg %p251
      // Predicated region
      $region37: #{tpu_custom_call.1} parent=5 // pred_check
        _
      $region38: #{tpu_custom_call.1} parent=5 // pred_check_branch
        %254 = sbr.rel (%p251) target = $region40
      $region39: #{tpu_custom_call.1} parent=5 // pred_region
        %s255 = ssub.s32 %s21, 1
        %s256 = sand.u32 %s34, 1
        %s257 = scalar_lea.sflag [#allocation3], %s256
        %s258 = sand.u32 %s34, 1
        %s259 = smul.addr %s258, 64
        %s260 = scalar_lea.vmem [#allocation2], %s259
        // Predicated region
        $region41: #{tpu_custom_call.1} parent=39 // pred_check
          %p261 = pneg %p47
        $region42: #{tpu_custom_call.1} parent=39 // pred_check_branch
          %263 = sbr.rel (%p261) target = $region44
        $region43: #{tpu_custom_call.1} parent=39 // pred_region
          %264 = dma.done %s257, 1024
        $region44: #{tpu_custom_call.1} parent=39 // pred_fallthru
          _
        %s265 = sand.u32 %s26, 1
        %s266 = scalar_lea.sflag [#allocation6], %s265
        %s267 = sand.u32 %s60, 1
        %s268 = smul.addr %s267, 8
        %s269 = scalar_lea.vmem [#allocation5], %s268
        // Predicated region
        $region45: #{tpu_custom_call.1} parent=39 // pred_check
          %p270 = pneg %p73
        $region46: #{tpu_custom_call.1} parent=39 // pred_check_branch
          %272 = sbr.rel (%p270) target = $region48
        $region47: #{tpu_custom_call.1} parent=39 // pred_region
          %273 = dma.done %s266, 128
        $region48: #{tpu_custom_call.1} parent=39 // pred_fallthru
          _
        // Predicated region
        $region49: #{tpu_custom_call.1} parent=39 // pred_check
          %p274 = pneg %p94
        $region50: #{tpu_custom_call.1} parent=39 // pred_check_branch
          %276 = sbr.rel (%p274) target = $region52
        $region51: #{tpu_custom_call.1} parent=39 // pred_region
          %277 = dma.done [#allocation6], 4096
        $region52: #{tpu_custom_call.1} parent=39 // pred_fallthru
          _
        // Predicated region
        $region53: #{tpu_custom_call.1} parent=39 // pred_check
          %p278 = pneg %p136
        $region54: #{tpu_custom_call.1} parent=39 // pred_check_branch
          %280 = sbr.rel (%p278) target = $region56
        $region55: #{tpu_custom_call.1} parent=39 // pred_region
          %281 = dma.done [#allocation9], 256
        $region56: #{tpu_custom_call.1} parent=39 // pred_fallthru
          _
        %s282 = sand.u32 %s34, 1
        %s283 = scalar_lea.sflag [#allocation3], %s282
        %s284 = sand.u32 %s34, 1
        %s285 = smul.addr %s284, 64
        %s286 = scalar_lea.vmem [#allocation2], %s285
        %p287 = pneg %p47
        %p288 = pneg %p44
        %s289 = sand.u32 %s26, 1
        %s290 = scalar_lea.sflag [#allocation6], %s289
        %s291 = sand.u32 %s60, 1
        %s292 = smul.addr %s291, 8
        %s293 = scalar_lea.vmem [#allocation5], %s292
        %p294 = pneg %p73
        %p295 = pneg %p70
        %p296 = pneg %p94
        %p297 = pneg %p91
        %p298 = pneg %p115
        %p299 = pneg %p112
        %p300 = pneg %p136
        %p301 = pneg %p133
        %p302 = pneg %p162
        %p303 = pneg %p159
        %s304 = sand.u32 %s149, 1
        %s305 = scalar_lea.sflag [#allocation4], %s304
        %s306 = sand.u32 %s149, 1
        %s307 = smul.addr %s306, 64
        %s308 = scalar_lea.vmem [#allocation10], %s307
        %s309 = smul.u32 8, %s26
        %s310 = smul.u32 8, %s26
        %v311 = vld [vmem:[%s260] sm:$0xff]
        %v312 = vld [vmem:[%s260 + $0x8] sm:$0xff]
        %v313 = vld [vmem:[%s260 + $0x10] sm:$0xff]
        %v314 = vld [vmem:[%s260 + $0x18] sm:$0xff]
        %v315 = vld [vmem:[%s260 + $0x20] sm:$0xff]
        %v316 = vld [vmem:[%s260 + $0x28] sm:$0xff]
        %v317 = vld [vmem:[%s260 + $0x30] sm:$0xff]
        %v318 = vld [vmem:[%s260 + $0x38] sm:$0xff]
        %v319 = vld [vmem:[#allocation7] sm:$0xff]
        %v320 = vld [vmem:[#allocation7 + $0x8] sm:$0xff]
        %v321 = vld [vmem:[#allocation7 + $0x10] sm:$0xff]
        %v322 = vld [vmem:[#allocation7 + $0x18] sm:$0xff]
        %v323 = vld [vmem:[#allocation7 + $0x20] sm:$0xff]
        %v324 = vld [vmem:[#allocation7 + $0x28] sm:$0xff]
        %v325 = vld [vmem:[#allocation7 + $0x30] sm:$0xff]
        %v326 = vld [vmem:[#allocation7 + $0x38] sm:$0xff]
        %v327 = vld [vmem:[#allocation7 + $0x40] sm:$0xff]
        %v328 = vld [vmem:[#allocation7 + $0x48] sm:$0xff]
        %v329 = vld [vmem:[#allocation7 + $0x50] sm:$0xff]
        %v330 = vld [vmem:[#allocation7 + $0x58] sm:$0xff]
        %v331 = vld [vmem:[#allocation7 + $0x60] sm:$0xff]
        %v332 = vld [vmem:[#allocation7 + $0x68] sm:$0xff]
        %v333 = vld [vmem:[#allocation7 + $0x70] sm:$0xff]
        %v334 = vld [vmem:[#allocation7 + $0x78] sm:$0xff]
        %335 = vmatprep.subr.mxu0 0.0
        %336 = vmatpush1.msra.mxu0 %v334
        %337 = vmatprep.subr.mxu0 0.0
        %338 = vmatpush1.msra.mxu0 %v333
        %339 = vmatprep.subr.mxu0 0.0
        %340 = vmatpush1.msra.mxu0 %v332
        %341 = vmatprep.subr.mxu0 0.0
        %342 = vmatpush1.msra.mxu0 %v331
        %343 = vmatprep.subr.mxu0 0.0
        %344 = vmatpush1.msra.mxu0 %v330
        %345 = vmatprep.subr.mxu0 0.0
        %346 = vmatpush1.msra.mxu0 %v329
        %347 = vmatprep.subr.mxu0 0.0
        %348 = vmatpush1.msra.mxu0 %v328
        %349 = vmatprep.subr.mxu0 0.0
        %350 = vmatpush1.msra.mxu0 %v327
        %351 = vmatprep.subr.mxu0 0.0
        %352 = vmatpush1.msra.mxu0 %v326
        %353 = vmatprep.subr.mxu0 0.0
        %354 = vmatpush1.msra.mxu0 %v325
        %355 = vmatprep.subr.mxu0 0.0
        %356 = vmatpush1.msra.mxu0 %v324
        %357 = vmatprep.subr.mxu0 0.0
        %358 = vmatpush1.msra.mxu0 %v323
        %359 = vmatprep.subr.mxu0 0.0
        %360 = vmatpush1.msra.mxu0 %v322
        %361 = vmatprep.subr.mxu0 0.0
        %362 = vmatpush1.msra.mxu0 %v321
        %363 = vmatprep.subr.mxu0 0.0
        %364 = vmatpush1.msra.mxu0 %v320
        %365 = vmatprep.subr.mxu0 0.0
        %366 = vmatpush1.msra.mxu0 %v319
        %367 = vmatprep.subr.mxu0 0.0
        %368 = vmatpush2.msra.mxu0 0.0
        %369 = vmatprep.subr.mxu0 0.0
        %370 = vmatpush2.msra.mxu0 0.0
        %371 = vmatprep.subr.mxu0 0.0
        %372 = vmatpush2.msra.mxu0 0.0
        %373 = vmatprep.subr.mxu0 0.0
        %374 = vmatpush2.msra.mxu0 0.0
        %375 = vmatprep.subr.mxu0 0.0
        %376 = vmatpush2.msra.mxu0 0.0
        %377 = vmatprep.subr.mxu0 0.0
        %378 = vmatpush2.msra.mxu0 0.0
        %379 = vmatprep.subr.mxu0 0.0
        %380 = vmatpush2.msra.mxu0 0.0
        %381 = vmatprep.subr.mxu0 0.0
        %382 = vmatpush2.msra.mxu0 0.0
        %383 = vmatprep.subr.mxu0 0.0
        %384 = vmatpush2.msra.mxu0 0.0
        %385 = vmatprep.subr.mxu0 0.0
        %386 = vmatpush2.msra.mxu0 0.0
        %387 = vmatprep.subr.mxu0 0.0
        %388 = vmatpush2.msra.mxu0 0.0
        %389 = vmatprep.subr.mxu0 0.0
        %390 = vmatpush2.msra.mxu0 0.0
        %391 = vmatprep.subr.mxu0 0.0
        %392 = vmatpush2.msra.mxu0 0.0
        %393 = vmatprep.subr.mxu0 0.0
        %394 = vmatpush2.msra.mxu0 0.0
        %395 = vmatprep.subr.mxu0 0.0
        %396 = vmatpush2.msra.mxu0 0.0
        %397 = vmatprep.subr.mxu0 0.0
        %398 = vmatpush2.msra.mxu0 0.0
        %399 = vmatprep.mubr.f32.mxu0 0.0
        %400 = vmatmul.mubr.f32.gmra.mxu0 %v311
        %v401 = vpop.f32.mrf.mxu0
        %v402 = vadd.f32 0.0, %v401
        %v403 = vpop.f32.mrf.mxu0
        %404 = vmatprep.mubr.f32.mxu0 0.0
        %405 = vmatmul.mubr.f32.gmra.mxu0 %v312
        %v406 = vpop.f32.mrf.mxu0
        %v407 = vadd.f32 0.0, %v406
        %v408 = vpop.f32.mrf.mxu0
        %409 = vmatprep.mubr.f32.mxu0 0.0
        %410 = vmatmul.mubr.f32.gmra.mxu0 %v313
        %v411 = vpop.f32.mrf.mxu0
        %v412 = vadd.f32 0.0, %v411
        %v413 = vpop.f32.mrf.mxu0
        %414 = vmatprep.mubr.f32.mxu0 0.0
        %415 = vmatmul.mubr.f32.gmra.mxu0 %v314
        %v416 = vpop.f32.mrf.mxu0
        %v417 = vadd.f32 0.0, %v416
        %v418 = vpop.f32.mrf.mxu0
        %419 = vmatprep.mubr.f32.mxu0 0.0
        %420 = vmatmul.mubr.f32.gmra.mxu0 %v315
        %v421 = vpop.f32.mrf.mxu0
        %v422 = vadd.f32 0.0, %v421
        %v423 = vpop.f32.mrf.mxu0
        %424 = vmatprep.mubr.f32.mxu0 0.0
        %425 = vmatmul.mubr.f32.gmra.mxu0 %v316
        %v426 = vpop.f32.mrf.mxu0
        %v427 = vadd.f32 0.0, %v426
        %v428 = vpop.f32.mrf.mxu0
        %429 = vmatprep.mubr.f32.mxu0 0.0
        %430 = vmatmul.mubr.f32.gmra.mxu0 %v317
        %v431 = vpop.f32.mrf.mxu0
        %v432 = vadd.f32 0.0, %v431
        %v433 = vpop.f32.mrf.mxu0
        %434 = vmatprep.mubr.f32.mxu0 0.0
        %435 = vmatmul.mubr.f32.gmra.mxu0 %v318
        %v436 = vpop.f32.mrf.mxu0
        %v437 = vadd.f32 0.0, %v436
        %v438 = vpop.f32.mrf.mxu0
        %439 = vdwg.mxu0
        %v440 = vld [vmem:[#allocation8] sm:$0xff]
        %v441 = vmul.f32 %v402, %v440
        %v442 = vmul.f32 %v407, %v440
        %v443 = vmul.f32 %v412, %v440
        %v444 = vmul.f32 %v417, %v440
        %v445 = vmul.f32 %v422, %v440
        %v446 = vmul.f32 %v427, %v440
        %v447 = vmul.f32 %v432, %v440
        %v448 = vmul.f32 %v437, %v440
        %s449 = scalar_lea.vmem [#allocation8], 8
        %v450 = vld [vmem:[%s449] sm:$0xff]
        %v451 = vadd.f32 %v441, %v450
        %v452 = vadd.f32 %v442, %v450
        %v453 = vadd.f32 %v443, %v450
        %v454 = vadd.f32 %v444, %v450
        %v455 = vadd.f32 %v445, %v450
        %v456 = vadd.f32 %v446, %v450
        %v457 = vadd.f32 %v447, %v450
        %v458 = vadd.f32 %v448, %v450
        %v459 = vtanh.pop %v451
        %v460 = vtanh.pop %v452
        %v461 = vtanh.pop %v453
        %v462 = vtanh.pop %v454
        %v463 = vtanh.pop %v455
        %v464 = vtanh.pop %v456
        %v465 = vtanh.pop %v457
        %v466 = vtanh.pop %v458
        %v467 = vld [vmem:[%s269] sm:$0xff]
        %s468 = scalar_lea.vmem [#allocation7], 128
        %v469 = vld [vmem:[%s468] sm:$0xff]
        %v470 = vld [vmem:[%s468 + $0x8] sm:$0xff]
        %v471 = vld [vmem:[%s468 + $0x10] sm:$0xff]
        %v472 = vld [vmem:[%s468 + $0x18] sm:$0xff]
        %v473 = vld [vmem:[%s468 + $0x20] sm:$0xff]
        %v474 = vld [vmem:[%s468 + $0x28] sm:$0xff]
        %v475 = vld [vmem:[%s468 + $0x30] sm:$0xff]
        %v476 = vld [vmem:[%s468 + $0x38] sm:$0xff]
        %v477 = vld [vmem:[%s468 + $0x40] sm:$0xff]
        %v478 = vld [vmem:[%s468 + $0x48] sm:$0xff]
        %v479 = vld [vmem:[%s468 + $0x50] sm:$0xff]
        %v480 = vld [vmem:[%s468 + $0x58] sm:$0xff]
        %v481 = vld [vmem:[%s468 + $0x60] sm:$0xff]
        %v482 = vld [vmem:[%s468 + $0x68] sm:$0xff]
        %v483 = vld [vmem:[%s468 + $0x70] sm:$0xff]
        %v484 = vld [vmem:[%s468 + $0x78] sm:$0xff]
        %v485 = vld [vmem:[%s3] sm:$0x1]
        %v486 = vlaneseq
        %v487 = vshrl.u32 %v486, 7
        %v488 = vsub.s32 0, %v487
        %v489 = vrot.slane %v485, %v488
        %490 = vmatprep.subr.mxu0 0.0
        %491 = vmatpush1.msra.mxu0 %v484
        %492 = vmatprep.subr.mxu0 0.0
        %493 = vmatpush1.msra.mxu0 %v483
        %494 = vmatprep.subr.mxu0 0.0
        %495 = vmatpush1.msra.mxu0 %v482
        %496 = vmatprep.subr.mxu0 0.0
        %497 = vmatpush1.msra.mxu0 %v481
        %498 = vmatprep.subr.mxu0 0.0
        %499 = vmatpush1.msra.mxu0 %v480
        %500 = vmatprep.subr.mxu0 0.0
        %501 = vmatpush1.msra.mxu0 %v479
        %502 = vmatprep.subr.mxu0 0.0
        %503 = vmatpush1.msra.mxu0 %v478
        %504 = vmatprep.subr.mxu0 0.0
        %505 = vmatpush1.msra.mxu0 %v477
        %506 = vmatprep.subr.mxu0 0.0
        %507 = vmatpush1.msra.mxu0 %v476
        %508 = vmatprep.subr.mxu0 0.0
        %509 = vmatpush1.msra.mxu0 %v475
        %510 = vmatprep.subr.mxu0 0.0
        %511 = vmatpush1.msra.mxu0 %v474
        %512 = vmatprep.subr.mxu0 0.0
        %513 = vmatpush1.msra.mxu0 %v473
        %514 = vmatprep.subr.mxu0 0.0
        %515 = vmatpush1.msra.mxu0 %v472
        %516 = vmatprep.subr.mxu0 0.0
        %517 = vmatpush1.msra.mxu0 %v471
        %518 = vmatprep.subr.mxu0 0.0
        %519 = vmatpush1.msra.mxu0 %v470
        %520 = vmatprep.subr.mxu0 0.0
        %521 = vmatpush1.msra.mxu0 %v469
        %522 = vmatprep.subr.mxu0 0.0
        %523 = vmatpush2.msra.mxu0 0.0
        %524 = vmatprep.subr.mxu0 0.0
        %525 = vmatpush2.msra.mxu0 0.0
        %526 = vmatprep.subr.mxu0 0.0
        %527 = vmatpush2.msra.mxu0 0.0
        %528 = vmatprep.subr.mxu0 0.0
        %529 = vmatpush2.msra.mxu0 0.0
        %530 = vmatprep.subr.mxu0 0.0
        %531 = vmatpush2.msra.mxu0 0.0
        %532 = vmatprep.subr.mxu0 0.0
        %533 = vmatpush2.msra.mxu0 0.0
        %534 = vmatprep.subr.mxu0 0.0
        %535 = vmatpush2.msra.mxu0 0.0
        %536 = vmatprep.subr.mxu0 0.0
        %537 = vmatpush2.msra.mxu0 0.0
        %538 = vmatprep.subr.mxu0 0.0
        %539 = vmatpush2.msra.mxu0 0.0
        %540 = vmatprep.subr.mxu0 0.0
        %541 = vmatpush2.msra.mxu0 0.0
        %542 = vmatprep.subr.mxu0 0.0
        %543 = vmatpush2.msra.mxu0 0.0
        %544 = vmatprep.subr.mxu0 0.0
        %545 = vmatpush2.msra.mxu0 0.0
        %546 = vmatprep.subr.mxu0 0.0
        %547 = vmatpush2.msra.mxu0 0.0
        %548 = vmatprep.subr.mxu0 0.0
        %549 = vmatpush2.msra.mxu0 0.0
        %550 = vmatprep.subr.mxu0 0.0
        %551 = vmatpush2.msra.mxu0 0.0
        %552 = vmatprep.subr.mxu0 0.0
        %553 = vmatpush2.msra.mxu0 0.0
        %554 = vmatprep.mubr.f32.mxu0 0.0
        %555 = vmatmul.mubr.f32.gmra.mxu0 %v467
        %v556 = vpop.f32.mrf.mxu0
        %v557 = vadd.f32 %v489, %v556
        %v558 = vpop.f32.mrf.mxu0
        %559 = vdwg.mxu0
        %v560 = vtanh.pop %v557
        %v562 = vcombine.high %v560, %v560
        %v564 = vunpack.c.l.s4 1966171168
        %v565 = vunpack.c.0.s8 %v564
        %v566 = vlaneseq
        %v567 = vshrl.u32 %v566, 7
        %v568 = vsub.s32 %v565, %v567
        %v569 = vrot.slane %v560, %v568
        %v571 = vunpack.c.l.s4 1966171168
        %v572 = vunpack.c.0.s8 %v571
        %v573 = vlaneseq
        %v574 = vshrl.u32 %v573, 7
        %v575 = vsub.s32 %v572, %v574
        %v576 = vrot.slane %v562, %v575
        %v577 = vcombine.high %v569, %v569
        %v578 = vcombine.high %v576, %v576
        %v580 = vunpack.c.l.s4 1966171168
        %v581 = vunpack.c.0.s8 %v580
        %v582 = vlaneseq
        %v583 = vshrl.u32 %v582, 7
        %v584 = vsub.s32 %v581, %v583
        %v585 = vrot.slane %v569, %v584
        %v587 = vunpack.c.l.s4 1966171168
        %v588 = vunpack.c.0.s8 %v587
        %v589 = vlaneseq
        %v590 = vshrl.u32 %v589, 7
        %v591 = vsub.s32 %v588, %v590
        %v592 = vrot.slane %v576, %v591
        %v594 = vunpack.c.l.s4 1966171168
        %v595 = vunpack.c.0.s8 %v594
        %v596 = vlaneseq
        %v597 = vshrl.u32 %v596, 7
        %v598 = vsub.s32 %v595, %v597
        %v599 = vrot.slane %v577, %v598
        %v601 = vunpack.c.l.s4 1966171168
        %v602 = vunpack.c.0.s8 %v601
        %v603 = vlaneseq
        %v604 = vshrl.u32 %v603, 7
        %v605 = vsub.s32 %v602, %v604
        %v606 = vrot.slane %v578, %v605
        %v607 = vcombine.high %v585, %v585
        %v608 = vcombine.high %v592, %v592
        %v609 = vcombine.high %v599, %v599
        %v610 = vcombine.high %v606, %v606
        %v611 = vlaneseq
        %v612 = vshrl.u32 %v611, 7
        %v613 = vsub.s32 0, %v612
        %v614 = vrot.slane %v585, %v613
        %v615 = vlaneseq
        %v616 = vshrl.u32 %v615, 7
        %v617 = vsub.s32 0, %v616
        %v618 = vrot.slane %v599, %v617
        %v619 = vlaneseq
        %v620 = vshrl.u32 %v619, 7
        %v621 = vsub.s32 0, %v620
        %v622 = vrot.slane %v607, %v621
        %v623 = vlaneseq
        %v624 = vshrl.u32 %v623, 7
        %v625 = vsub.s32 0, %v624
        %v626 = vrot.slane %v609, %v625
        %v627 = vlaneseq
        %v628 = vshrl.u32 %v627, 7
        %v629 = vsub.s32 0, %v628
        %v630 = vrot.slane %v592, %v629
        %v631 = vlaneseq
        %v632 = vshrl.u32 %v631, 7
        %v633 = vsub.s32 0, %v632
        %v634 = vrot.slane %v606, %v633
        %v635 = vlaneseq
        %v636 = vshrl.u32 %v635, 7
        %v637 = vsub.s32 0, %v636
        %v638 = vrot.slane %v608, %v637
        %v639 = vlaneseq
        %v640 = vshrl.u32 %v639, 7
        %v641 = vsub.s32 0, %v640
        %v642 = vrot.slane %v610, %v641
        %v651 = vmul.f32 %v459, %v614
        %v652 = vmul.f32 %v460, %v618
        %v653 = vmul.f32 %v461, %v622
        %v654 = vmul.f32 %v462, %v626
        %v655 = vmul.f32 %v463, %v630
        %v656 = vmul.f32 %v464, %v634
        %v657 = vmul.f32 %v465, %v638
        %v658 = vmul.f32 %v466, %v642
        %v659 = vld [vmem:[%s3 + $0x1] sm:$0x1]
        %v660 = vlaneseq
        %v661 = vshrl.u32 %v660, 7
        %v662 = vsub.s32 0, %v661
        %v663 = vrot.slane %v659, %v662
        %v664 = vmul.f32 %v651, %v663
        %v665 = vmul.f32 %v652, %v663
        %v666 = vmul.f32 %v653, %v663
        %v667 = vmul.f32 %v654, %v663
        %v668 = vmul.f32 %v655, %v663
        %v669 = vmul.f32 %v656, %v663
        %v670 = vmul.f32 %v657, %v663
        %v671 = vmul.f32 %v658, %v663
        %672 = vadd.xlane.f32.xlu0 %v664
        %v673 = vpop.xlane.xlu0 %672
        %674 = vadd.xlane.f32.xlu0 %v665
        %v675 = vpop.xlane.xlu0 %674
        %676 = vadd.xlane.f32.xlu0 %v666
        %v677 = vpop.xlane.xlu0 %676
        %678 = vadd.xlane.f32.xlu0 %v667
        %v679 = vpop.xlane.xlu0 %678
        %680 = vadd.xlane.f32.xlu0 %v668
        %v681 = vpop.xlane.xlu0 %680
        %682 = vadd.xlane.f32.xlu0 %v669
        %v683 = vpop.xlane.xlu0 %682
        %684 = vadd.xlane.f32.xlu0 %v670
        %v685 = vpop.xlane.xlu0 %684
        %686 = vadd.xlane.f32.xlu0 %v671
        %v687 = vpop.xlane.xlu0 %686
        %v688 = vrot.slane %v673, 4
        %v689 = vmax.f32 %v673, %v688
        %v690 = vrot.slane %v689, 2
        %v691 = vmax.f32 %v689, %v690
        %v692 = vrot.slane %v691, 1
        %v693 = vmax.f32 %v691, %v692
        %v694 = vrot.slane %v675, 4
        %v695 = vmax.f32 %v675, %v694
        %v696 = vrot.slane %v695, 2
        %v697 = vmax.f32 %v695, %v696
        %v698 = vrot.slane %v697, 1
        %v699 = vmax.f32 %v697, %v698
        %v700 = vrot.slane %v677, 4
        %v701 = vmax.f32 %v677, %v700
        %v702 = vrot.slane %v701, 2
        %v703 = vmax.f32 %v701, %v702
        %v704 = vrot.slane %v703, 1
        %v705 = vmax.f32 %v703, %v704
        %v706 = vrot.slane %v679, 4
        %v707 = vmax.f32 %v679, %v706
        %v708 = vrot.slane %v707, 2
        %v709 = vmax.f32 %v707, %v708
        %v710 = vrot.slane %v709, 1
        %v711 = vmax.f32 %v709, %v710
        %v712 = vrot.slane %v681, 4
        %v713 = vmax.f32 %v681, %v712
        %v714 = vrot.slane %v713, 2
        %v715 = vmax.f32 %v713, %v714
        %v716 = vrot.slane %v715, 1
        %v717 = vmax.f32 %v715, %v716
        %v718 = vrot.slane %v683, 4
        %v719 = vmax.f32 %v683, %v718
        %v720 = vrot.slane %v719, 2
        %v721 = vmax.f32 %v719, %v720
        %v722 = vrot.slane %v721, 1
        %v723 = vmax.f32 %v721, %v722
        %v724 = vrot.slane %v685, 4
        %v725 = vmax.f32 %v685, %v724
        %v726 = vrot.slane %v725, 2
        %v727 = vmax.f32 %v725, %v726
        %v728 = vrot.slane %v727, 1
        %v729 = vmax.f32 %v727, %v728
        %v730 = vrot.slane %v687, 4
        %v731 = vmax.f32 %v687, %v730
        %v732 = vrot.slane %v731, 2
        %v733 = vmax.f32 %v731, %v732
        %v734 = vrot.slane %v733, 1
        %v735 = vmax.f32 %v733, %v734
        %v736 = vsub.f32 %v673, %v693
        %v737 = vsub.f32 %v675, %v699
        %v738 = vsub.f32 %v677, %v705
        %v739 = vsub.f32 %v679, %v711
        %v740 = vsub.f32 %v681, %v717
        %v741 = vsub.f32 %v683, %v723
        %v742 = vsub.f32 %v685, %v729
        %v743 = vsub.f32 %v687, %v735
        %v744 = vmul.f32 %v736, 1.442695
        %v745 = vpow.pop %v744
        %v746 = vmul.f32 %v737, 1.442695
        %v747 = vpow.pop %v746
        %v748 = vmul.f32 %v738, 1.442695
        %v749 = vpow.pop %v748
        %v750 = vmul.f32 %v739, 1.442695
        %v751 = vpow.pop %v750
        %v752 = vmul.f32 %v740, 1.442695
        %v753 = vpow.pop %v752
        %v754 = vmul.f32 %v741, 1.442695
        %v755 = vpow.pop %v754
        %v756 = vmul.f32 %v742, 1.442695
        %v757 = vpow.pop %v756
        %v758 = vmul.f32 %v743, 1.442695
        %v759 = vpow.pop %v758
        %v760 = vrot.slane %v745, 4
        %v761 = vadd.f32 %v745, %v760
        %v762 = vrot.slane %v761, 2
        %v763 = vadd.f32 %v761, %v762
        %v764 = vrot.slane %v763, 1
        %v765 = vadd.f32 %v763, %v764
        %v766 = vrot.slane %v747, 4
        %v767 = vadd.f32 %v747, %v766
        %v768 = vrot.slane %v767, 2
        %v769 = vadd.f32 %v767, %v768
        %v770 = vrot.slane %v769, 1
        %v771 = vadd.f32 %v769, %v770
        %v772 = vrot.slane %v749, 4
        %v773 = vadd.f32 %v749, %v772
        %v774 = vrot.slane %v773, 2
        %v775 = vadd.f32 %v773, %v774
        %v776 = vrot.slane %v775, 1
        %v777 = vadd.f32 %v775, %v776
        %v778 = vrot.slane %v751, 4
        %v779 = vadd.f32 %v751, %v778
        %v780 = vrot.slane %v779, 2
        %v781 = vadd.f32 %v779, %v780
        %v782 = vrot.slane %v781, 1
        %v783 = vadd.f32 %v781, %v782
        %v784 = vrot.slane %v753, 4
        %v785 = vadd.f32 %v753, %v784
        %v786 = vrot.slane %v785, 2
        %v787 = vadd.f32 %v785, %v786
        %v788 = vrot.slane %v787, 1
        %v789 = vadd.f32 %v787, %v788
        %v790 = vrot.slane %v755, 4
        %v791 = vadd.f32 %v755, %v790
        %v792 = vrot.slane %v791, 2
        %v793 = vadd.f32 %v791, %v792
        %v794 = vrot.slane %v793, 1
        %v795 = vadd.f32 %v793, %v794
        %v796 = vrot.slane %v757, 4
        %v797 = vadd.f32 %v757, %v796
        %v798 = vrot.slane %v797, 2
        %v799 = vadd.f32 %v797, %v798
        %v800 = vrot.slane %v799, 1
        %v801 = vadd.f32 %v799, %v800
        %v802 = vrot.slane %v759, 4
        %v803 = vadd.f32 %v759, %v802
        %v804 = vrot.slane %v803, 2
        %v805 = vadd.f32 %v803, %v804
        %v806 = vrot.slane %v805, 1
        %v807 = vadd.f32 %v805, %v806
        %v808 = vrcp.pop %v765
        %v809 = vrcp.pop %v771
        %v810 = vrcp.pop %v777
        %v811 = vrcp.pop %v783
        %v812 = vrcp.pop %v789
        %v813 = vrcp.pop %v795
        %v814 = vrcp.pop %v801
        %v815 = vrcp.pop %v807
        %v816 = vmul.f32 %v745, %v808
        %v817 = vmul.f32 %v747, %v809
        %v818 = vmul.f32 %v749, %v810
        %v819 = vmul.f32 %v751, %v811
        %v820 = vmul.f32 %v753, %v812
        %v821 = vmul.f32 %v755, %v813
        %v822 = vmul.f32 %v757, %v814
        %v823 = vmul.f32 %v759, %v815
        %v824 = vmul.f32 %v816, %v311
        %v825 = vmul.f32 %v817, %v312
        %v826 = vmul.f32 %v818, %v313
        %v827 = vmul.f32 %v819, %v314
        %v828 = vmul.f32 %v820, %v315
        %v829 = vmul.f32 %v821, %v316
        %v830 = vmul.f32 %v822, %v317
        %v831 = vmul.f32 %v823, %v318
        %v832 = vrot.slane %v824, 4
        %v833 = vadd.f32 %v824, %v832
        %v834 = vrot.slane %v833, 2
        %v835 = vadd.f32 %v833, %v834
        %v836 = vrot.slane %v835, 1
        %v837 = vadd.f32 %v835, %v836
        %v838 = vrot.slane %v825, 4
        %v839 = vadd.f32 %v825, %v838
        %v840 = vrot.slane %v839, 2
        %v841 = vadd.f32 %v839, %v840
        %v842 = vrot.slane %v841, 1
        %v843 = vadd.f32 %v841, %v842
        %v844 = vrot.slane %v826, 4
        %v845 = vadd.f32 %v826, %v844
        %v846 = vrot.slane %v845, 2
        %v847 = vadd.f32 %v845, %v846
        %v848 = vrot.slane %v847, 1
        %v849 = vadd.f32 %v847, %v848
        %v850 = vrot.slane %v827, 4
        %v851 = vadd.f32 %v827, %v850
        %v852 = vrot.slane %v851, 2
        %v853 = vadd.f32 %v851, %v852
        %v854 = vrot.slane %v853, 1
        %v855 = vadd.f32 %v853, %v854
        %v856 = vrot.slane %v828, 4
        %v857 = vadd.f32 %v828, %v856
        %v858 = vrot.slane %v857, 2
        %v859 = vadd.f32 %v857, %v858
        %v860 = vrot.slane %v859, 1
        %v861 = vadd.f32 %v859, %v860
        %v862 = vrot.slane %v829, 4
        %v863 = vadd.f32 %v829, %v862
        %v864 = vrot.slane %v863, 2
        %v865 = vadd.f32 %v863, %v864
        %v866 = vrot.slane %v865, 1
        %v867 = vadd.f32 %v865, %v866
        %v868 = vrot.slane %v830, 4
        %v869 = vadd.f32 %v830, %v868
        %v870 = vrot.slane %v869, 2
        %v871 = vadd.f32 %v869, %v870
        %v872 = vrot.slane %v871, 1
        %v873 = vadd.f32 %v871, %v872
        %v874 = vrot.slane %v831, 4
        %v875 = vadd.f32 %v831, %v874
        %v876 = vrot.slane %v875, 2
        %v877 = vadd.f32 %v875, %v876
        %v878 = vrot.slane %v877, 1
        %v879 = vadd.f32 %v877, %v878
        %v880 = vmul.f32 %v837, %v837
        %v881 = vmul.f32 %v843, %v843
        %v882 = vmul.f32 %v849, %v849
        %v883 = vmul.f32 %v855, %v855
        %v884 = vmul.f32 %v861, %v861
        %v885 = vmul.f32 %v867, %v867
        %v886 = vmul.f32 %v873, %v873
        %v887 = vmul.f32 %v879, %v879
        %888 = vadd.xlane.f32.xlu0 %v880
        %v889 = vpop.xlane.xlu0 %888
        %890 = vadd.xlane.f32.xlu0 %v881
        %v891 = vpop.xlane.xlu0 %890
        %892 = vadd.xlane.f32.xlu0 %v882
        %v893 = vpop.xlane.xlu0 %892
        %894 = vadd.xlane.f32.xlu0 %v883
        %v895 = vpop.xlane.xlu0 %894
        %896 = vadd.xlane.f32.xlu0 %v884
        %v897 = vpop.xlane.xlu0 %896
        %898 = vadd.xlane.f32.xlu0 %v885
        %v899 = vpop.xlane.xlu0 %898
        %900 = vadd.xlane.f32.xlu0 %v886
        %v901 = vpop.xlane.xlu0 %900
        %902 = vadd.xlane.f32.xlu0 %v887
        %v903 = vpop.xlane.xlu0 %902
        %v904 = vrsqrt.pop %v889
        %v905 = vmul.f32 %v889, %v904
        %vm906 = vcmp.eq.f32.partialorder %v889, inf
        %v907 = vsel %vm906, %v889, %v905
        %vm908 = vcmp.eq.f32.partialorder %v889, 0.0
        %v909 = vand.u32 %v889, 2147483648
        %v910 = vsel %vm908, %v909, %v907
        %v911 = vrsqrt.pop %v891
        %v912 = vmul.f32 %v891, %v911
        %vm913 = vcmp.eq.f32.partialorder %v891, inf
        %v914 = vsel %vm913, %v891, %v912
        %vm915 = vcmp.eq.f32.partialorder %v891, 0.0
        %v916 = vand.u32 %v891, 2147483648
        %v917 = vsel %vm915, %v916, %v914
        %v918 = vrsqrt.pop %v893
        %v919 = vmul.f32 %v893, %v918
        %vm920 = vcmp.eq.f32.partialorder %v893, inf
        %v921 = vsel %vm920, %v893, %v919
        %vm922 = vcmp.eq.f32.partialorder %v893, 0.0
        %v923 = vand.u32 %v893, 2147483648
        %v924 = vsel %vm922, %v923, %v921
        %v925 = vrsqrt.pop %v895
        %v926 = vmul.f32 %v895, %v925
        %vm927 = vcmp.eq.f32.partialorder %v895, inf
        %v928 = vsel %vm927, %v895, %v926
        %vm929 = vcmp.eq.f32.partialorder %v895, 0.0
        %v930 = vand.u32 %v895, 2147483648
        %v931 = vsel %vm929, %v930, %v928
        %v932 = vrsqrt.pop %v897
        %v933 = vmul.f32 %v897, %v932
        %vm934 = vcmp.eq.f32.partialorder %v897, inf
        %v935 = vsel %vm934, %v897, %v933
        %vm936 = vcmp.eq.f32.partialorder %v897, 0.0
        %v937 = vand.u32 %v897, 2147483648
        %v938 = vsel %vm936, %v937, %v935
        %v939 = vrsqrt.pop %v899
        %v940 = vmul.f32 %v899, %v939
        %vm941 = vcmp.eq.f32.partialorder %v899, inf
        %v942 = vsel %vm941, %v899, %v940
        %vm943 = vcmp.eq.f32.partialorder %v899, 0.0
        %v944 = vand.u32 %v899, 2147483648
        %v945 = vsel %vm943, %v944, %v942
        %v946 = vrsqrt.pop %v901
        %v947 = vmul.f32 %v901, %v946
        %vm948 = vcmp.eq.f32.partialorder %v901, inf
        %v949 = vsel %vm948, %v901, %v947
        %vm950 = vcmp.eq.f32.partialorder %v901, 0.0
        %v951 = vand.u32 %v901, 2147483648
        %v952 = vsel %vm950, %v951, %v949
        %v953 = vrsqrt.pop %v903
        %v954 = vmul.f32 %v903, %v953
        %vm955 = vcmp.eq.f32.partialorder %v903, inf
        %v956 = vsel %vm955, %v903, %v954
        %vm957 = vcmp.eq.f32.partialorder %v903, 0.0
        %v958 = vand.u32 %v903, 2147483648
        %v959 = vsel %vm957, %v958, %v956
        %v960 = vadd.f32 %v910, 1e-08
        %v961 = vadd.f32 %v917, 1e-08
        %v962 = vadd.f32 %v924, 1e-08
        %v963 = vadd.f32 %v931, 1e-08
        %v964 = vadd.f32 %v938, 1e-08
        %v965 = vadd.f32 %v945, 1e-08
        %v966 = vadd.f32 %v952, 1e-08
        %v967 = vadd.f32 %v959, 1e-08
        %v968 = vrcp.pop %v960
        %v969 = vmul.f32 %v837, %v968
        %v970 = vrcp.pop %v961
        %v971 = vmul.f32 %v843, %v970
        %v972 = vrcp.pop %v962
        %v973 = vmul.f32 %v849, %v972
        %v974 = vrcp.pop %v963
        %v975 = vmul.f32 %v855, %v974
        %v976 = vrcp.pop %v964
        %v977 = vmul.f32 %v861, %v976
        %v978 = vrcp.pop %v965
        %v979 = vmul.f32 %v867, %v978
        %v980 = vrcp.pop %v966
        %v981 = vmul.f32 %v873, %v980
        %v982 = vrcp.pop %v967
        %v983 = vmul.f32 %v879, %v982
        %v984 = vmul.f32 %v311, %v969
        %v985 = vmul.f32 %v312, %v971
        %v986 = vmul.f32 %v313, %v973
        %v987 = vmul.f32 %v314, %v975
        %v988 = vmul.f32 %v315, %v977
        %v989 = vmul.f32 %v316, %v979
        %v990 = vmul.f32 %v317, %v981
        %v991 = vmul.f32 %v318, %v983
        %992 = vadd.xlane.f32.xlu0 %v984
        %v993 = vpop.xlane.xlu0 %992
        %994 = vadd.xlane.f32.xlu0 %v985
        %v995 = vpop.xlane.xlu0 %994
        %996 = vadd.xlane.f32.xlu0 %v986
        %v997 = vpop.xlane.xlu0 %996
        %998 = vadd.xlane.f32.xlu0 %v987
        %v999 = vpop.xlane.xlu0 %998
        %1000 = vadd.xlane.f32.xlu0 %v988
        %v1001 = vpop.xlane.xlu0 %1000
        %1002 = vadd.xlane.f32.xlu0 %v989
        %v1003 = vpop.xlane.xlu0 %1002
        %1004 = vadd.xlane.f32.xlu0 %v990
        %v1005 = vpop.xlane.xlu0 %1004
        %1006 = vadd.xlane.f32.xlu0 %v991
        %v1007 = vpop.xlane.xlu0 %1006
        %v1008 = vmul.f32 %v993, 9.0
        %v1009 = vmul.f32 %v995, 9.0
        %v1010 = vmul.f32 %v997, 9.0
        %v1011 = vmul.f32 %v999, 9.0
        %v1012 = vmul.f32 %v1001, 9.0
        %v1013 = vmul.f32 %v1003, 9.0
        %v1014 = vmul.f32 %v1005, 9.0
        %v1015 = vmul.f32 %v1007, 9.0
        %v1016 = vrot.slane %v1008, 4
        %v1017 = vmax.f32 %v1008, %v1016
        %v1018 = vrot.slane %v1017, 2
        %v1019 = vmax.f32 %v1017, %v1018
        %v1020 = vrot.slane %v1019, 1
        %v1021 = vmax.f32 %v1019, %v1020
        %v1022 = vrot.slane %v1009, 4
        %v1023 = vmax.f32 %v1009, %v1022
        %v1024 = vrot.slane %v1023, 2
        %v1025 = vmax.f32 %v1023, %v1024
        %v1026 = vrot.slane %v1025, 1
        %v1027 = vmax.f32 %v1025, %v1026
        %v1028 = vrot.slane %v1010, 4
        %v1029 = vmax.f32 %v1010, %v1028
        %v1030 = vrot.slane %v1029, 2
        %v1031 = vmax.f32 %v1029, %v1030
        %v1032 = vrot.slane %v1031, 1
        %v1033 = vmax.f32 %v1031, %v1032
        %v1034 = vrot.slane %v1011, 4
        %v1035 = vmax.f32 %v1011, %v1034
        %v1036 = vrot.slane %v1035, 2
        %v1037 = vmax.f32 %v1035, %v1036
        %v1038 = vrot.slane %v1037, 1
        %v1039 = vmax.f32 %v1037, %v1038
        %v1040 = vrot.slane %v1012, 4
        %v1041 = vmax.f32 %v1012, %v1040
        %v1042 = vrot.slane %v1041, 2
        %v1043 = vmax.f32 %v1041, %v1042
        %v1044 = vrot.slane %v1043, 1
        %v1045 = vmax.f32 %v1043, %v1044
        %v1046 = vrot.slane %v1013, 4
        %v1047 = vmax.f32 %v1013, %v1046
        %v1048 = vrot.slane %v1047, 2
        %v1049 = vmax.f32 %v1047, %v1048
        %v1050 = vrot.slane %v1049, 1
        %v1051 = vmax.f32 %v1049, %v1050
        %v1052 = vrot.slane %v1014, 4
        %v1053 = vmax.f32 %v1014, %v1052
        %v1054 = vrot.slane %v1053, 2
        %v1055 = vmax.f32 %v1053, %v1054
        %v1056 = vrot.slane %v1055, 1
        %v1057 = vmax.f32 %v1055, %v1056
        %v1058 = vrot.slane %v1015, 4
        %v1059 = vmax.f32 %v1015, %v1058
        %v1060 = vrot.slane %v1059, 2
        %v1061 = vmax.f32 %v1059, %v1060
        %v1062 = vrot.slane %v1061, 1
        %v1063 = vmax.f32 %v1061, %v1062
        %v1064 = vsub.f32 %v1008, %v1021
        %v1065 = vsub.f32 %v1009, %v1027
        %v1066 = vsub.f32 %v1010, %v1033
        %v1067 = vsub.f32 %v1011, %v1039
        %v1068 = vsub.f32 %v1012, %v1045
        %v1069 = vsub.f32 %v1013, %v1051
        %v1070 = vsub.f32 %v1014, %v1057
        %v1071 = vsub.f32 %v1015, %v1063
        %v1072 = vmul.f32 %v1064, 1.442695
        %v1073 = vpow.pop %v1072
        %v1074 = vmul.f32 %v1065, 1.442695
        %v1075 = vpow.pop %v1074
        %v1076 = vmul.f32 %v1066, 1.442695
        %v1077 = vpow.pop %v1076
        %v1078 = vmul.f32 %v1067, 1.442695
        %v1079 = vpow.pop %v1078
        %v1080 = vmul.f32 %v1068, 1.442695
        %v1081 = vpow.pop %v1080
        %v1082 = vmul.f32 %v1069, 1.442695
        %v1083 = vpow.pop %v1082
        %v1084 = vmul.f32 %v1070, 1.442695
        %v1085 = vpow.pop %v1084
        %v1086 = vmul.f32 %v1071, 1.442695
        %v1087 = vpow.pop %v1086
        %v1088 = vrot.slane %v1073, 4
        %v1089 = vadd.f32 %v1073, %v1088
        %v1090 = vrot.slane %v1089, 2
        %v1091 = vadd.f32 %v1089, %v1090
        %v1092 = vrot.slane %v1091, 1
        %v1093 = vadd.f32 %v1091, %v1092
        %v1094 = vrot.slane %v1075, 4
        %v1095 = vadd.f32 %v1075, %v1094
        %v1096 = vrot.slane %v1095, 2
        %v1097 = vadd.f32 %v1095, %v1096
        %v1098 = vrot.slane %v1097, 1
        %v1099 = vadd.f32 %v1097, %v1098
        %v1100 = vrot.slane %v1077, 4
        %v1101 = vadd.f32 %v1077, %v1100
        %v1102 = vrot.slane %v1101, 2
        %v1103 = vadd.f32 %v1101, %v1102
        %v1104 = vrot.slane %v1103, 1
        %v1105 = vadd.f32 %v1103, %v1104
        %v1106 = vrot.slane %v1079, 4
        %v1107 = vadd.f32 %v1079, %v1106
        %v1108 = vrot.slane %v1107, 2
        %v1109 = vadd.f32 %v1107, %v1108
        %v1110 = vrot.slane %v1109, 1
        %v1111 = vadd.f32 %v1109, %v1110
        %v1112 = vrot.slane %v1081, 4
        %v1113 = vadd.f32 %v1081, %v1112
        %v1114 = vrot.slane %v1113, 2
        %v1115 = vadd.f32 %v1113, %v1114
        %v1116 = vrot.slane %v1115, 1
        %v1117 = vadd.f32 %v1115, %v1116
        %v1118 = vrot.slane %v1083, 4
        %v1119 = vadd.f32 %v1083, %v1118
        %v1120 = vrot.slane %v1119, 2
        %v1121 = vadd.f32 %v1119, %v1120
        %v1122 = vrot.slane %v1121, 1
        %v1123 = vadd.f32 %v1121, %v1122
        %v1124 = vrot.slane %v1085, 4
        %v1125 = vadd.f32 %v1085, %v1124
        %v1126 = vrot.slane %v1125, 2
        %v1127 = vadd.f32 %v1125, %v1126
        %v1128 = vrot.slane %v1127, 1
        %v1129 = vadd.f32 %v1127, %v1128
        %v1130 = vrot.slane %v1087, 4
        %v1131 = vadd.f32 %v1087, %v1130
        %v1132 = vrot.slane %v1131, 2
        %v1133 = vadd.f32 %v1131, %v1132
        %v1134 = vrot.slane %v1133, 1
        %v1135 = vadd.f32 %v1133, %v1134
        %v1136 = vrcp.pop %v1093
        %v1137 = vrcp.pop %v1099
        %v1138 = vrcp.pop %v1105
        %v1139 = vrcp.pop %v1111
        %v1140 = vrcp.pop %v1117
        %v1141 = vrcp.pop %v1123
        %v1142 = vrcp.pop %v1129
        %v1143 = vrcp.pop %v1135
        %v1144 = vmul.f32 %v1073, %v1136
        %v1145 = vmul.f32 %v1075, %v1137
        %v1146 = vmul.f32 %v1077, %v1138
        %v1147 = vmul.f32 %v1079, %v1139
        %v1148 = vmul.f32 %v1081, %v1140
        %v1149 = vmul.f32 %v1083, %v1141
        %v1150 = vmul.f32 %v1085, %v1142
        %v1151 = vmul.f32 %v1087, %v1143
        %v1152 = vmul.f32 %v1144, %v1144
        %v1153 = vmul.f32 %v1145, %v1145
        %v1154 = vmul.f32 %v1146, %v1146
        %v1155 = vmul.f32 %v1147, %v1147
        %v1156 = vmul.f32 %v1148, %v1148
        %v1157 = vmul.f32 %v1149, %v1149
        %v1158 = vmul.f32 %v1150, %v1150
        %v1159 = vmul.f32 %v1151, %v1151
        %v1160 = vrot.slane %v1152, 4
        %v1161 = vadd.f32 %v1152, %v1160
        %v1162 = vrot.slane %v1161, 2
        %v1163 = vadd.f32 %v1161, %v1162
        %v1164 = vrot.slane %v1163, 1
        %v1165 = vadd.f32 %v1163, %v1164
        %v1166 = vrot.slane %v1153, 4
        %v1167 = vadd.f32 %v1153, %v1166
        %v1168 = vrot.slane %v1167, 2
        %v1169 = vadd.f32 %v1167, %v1168
        %v1170 = vrot.slane %v1169, 1
        %v1171 = vadd.f32 %v1169, %v1170
        %v1172 = vrot.slane %v1154, 4
        %v1173 = vadd.f32 %v1154, %v1172
        %v1174 = vrot.slane %v1173, 2
        %v1175 = vadd.f32 %v1173, %v1174
        %v1176 = vrot.slane %v1175, 1
        %v1177 = vadd.f32 %v1175, %v1176
        %v1178 = vrot.slane %v1155, 4
        %v1179 = vadd.f32 %v1155, %v1178
        %v1180 = vrot.slane %v1179, 2
        %v1181 = vadd.f32 %v1179, %v1180
        %v1182 = vrot.slane %v1181, 1
        %v1183 = vadd.f32 %v1181, %v1182
        %v1184 = vrot.slane %v1156, 4
        %v1185 = vadd.f32 %v1156, %v1184
        %v1186 = vrot.slane %v1185, 2
        %v1187 = vadd.f32 %v1185, %v1186
        %v1188 = vrot.slane %v1187, 1
        %v1189 = vadd.f32 %v1187, %v1188
        %v1190 = vrot.slane %v1157, 4
        %v1191 = vadd.f32 %v1157, %v1190
        %v1192 = vrot.slane %v1191, 2
        %v1193 = vadd.f32 %v1191, %v1192
        %v1194 = vrot.slane %v1193, 1
        %v1195 = vadd.f32 %v1193, %v1194
        %v1196 = vrot.slane %v1158, 4
        %v1197 = vadd.f32 %v1158, %v1196
        %v1198 = vrot.slane %v1197, 2
        %v1199 = vadd.f32 %v1197, %v1198
        %v1200 = vrot.slane %v1199, 1
        %v1201 = vadd.f32 %v1199, %v1200
        %v1202 = vrot.slane %v1159, 4
        %v1203 = vadd.f32 %v1159, %v1202
        %v1204 = vrot.slane %v1203, 2
        %v1205 = vadd.f32 %v1203, %v1204
        %v1206 = vrot.slane %v1205, 1
        %v1207 = vadd.f32 %v1205, %v1206
        %v1208 = vrsqrt.pop %v1165
        %v1209 = vmul.f32 %v1165, %v1208
        %vm1210 = vcmp.eq.f32.partialorder %v1165, inf
        %v1211 = vsel %vm1210, %v1165, %v1209
        %vm1212 = vcmp.eq.f32.partialorder %v1165, 0.0
        %v1213 = vand.u32 %v1165, 2147483648
        %v1214 = vsel %vm1212, %v1213, %v1211
        %v1215 = vrsqrt.pop %v1171
        %v1216 = vmul.f32 %v1171, %v1215
        %vm1217 = vcmp.eq.f32.partialorder %v1171, inf
        %v1218 = vsel %vm1217, %v1171, %v1216
        %vm1219 = vcmp.eq.f32.partialorder %v1171, 0.0
        %v1220 = vand.u32 %v1171, 2147483648
        %v1221 = vsel %vm1219, %v1220, %v1218
        %v1222 = vrsqrt.pop %v1177
        %v1223 = vmul.f32 %v1177, %v1222
        %vm1224 = vcmp.eq.f32.partialorder %v1177, inf
        %v1225 = vsel %vm1224, %v1177, %v1223
        %vm1226 = vcmp.eq.f32.partialorder %v1177, 0.0
        %v1227 = vand.u32 %v1177, 2147483648
        %v1228 = vsel %vm1226, %v1227, %v1225
        %v1229 = vrsqrt.pop %v1183
        %v1230 = vmul.f32 %v1183, %v1229
        %vm1231 = vcmp.eq.f32.partialorder %v1183, inf
        %v1232 = vsel %vm1231, %v1183, %v1230
        %vm1233 = vcmp.eq.f32.partialorder %v1183, 0.0
        %v1234 = vand.u32 %v1183, 2147483648
        %v1235 = vsel %vm1233, %v1234, %v1232
        %v1236 = vrsqrt.pop %v1189
        %v1237 = vmul.f32 %v1189, %v1236
        %vm1238 = vcmp.eq.f32.partialorder %v1189, inf
        %v1239 = vsel %vm1238, %v1189, %v1237
        %vm1240 = vcmp.eq.f32.partialorder %v1189, 0.0
        %v1241 = vand.u32 %v1189, 2147483648
        %v1242 = vsel %vm1240, %v1241, %v1239
        %v1243 = vrsqrt.pop %v1195
        %v1244 = vmul.f32 %v1195, %v1243
        %vm1245 = vcmp.eq.f32.partialorder %v1195, inf
        %v1246 = vsel %vm1245, %v1195, %v1244
        %vm1247 = vcmp.eq.f32.partialorder %v1195, 0.0
        %v1248 = vand.u32 %v1195, 2147483648
        %v1249 = vsel %vm1247, %v1248, %v1246
        %v1250 = vrsqrt.pop %v1201
        %v1251 = vmul.f32 %v1201, %v1250
        %vm1252 = vcmp.eq.f32.partialorder %v1201, inf
        %v1253 = vsel %vm1252, %v1201, %v1251
        %vm1254 = vcmp.eq.f32.partialorder %v1201, 0.0
        %v1255 = vand.u32 %v1201, 2147483648
        %v1256 = vsel %vm1254, %v1255, %v1253
        %v1257 = vrsqrt.pop %v1207
        %v1258 = vmul.f32 %v1207, %v1257
        %vm1259 = vcmp.eq.f32.partialorder %v1207, inf
        %v1260 = vsel %vm1259, %v1207, %v1258
        %vm1261 = vcmp.eq.f32.partialorder %v1207, 0.0
        %v1262 = vand.u32 %v1207, 2147483648
        %v1263 = vsel %vm1261, %v1262, %v1260
        %v1264 = vadd.f32 %v1214, 1e-08
        %v1265 = vadd.f32 %v1221, 1e-08
        %v1266 = vadd.f32 %v1228, 1e-08
        %v1267 = vadd.f32 %v1235, 1e-08
        %v1268 = vadd.f32 %v1242, 1e-08
        %v1269 = vadd.f32 %v1249, 1e-08
        %v1270 = vadd.f32 %v1256, 1e-08
        %v1271 = vadd.f32 %v1263, 1e-08
        %v1272 = vrcp.pop %v1264
        %v1273 = vrcp.pop %v1265
        %v1274 = vrcp.pop %v1266
        %v1275 = vrcp.pop %v1267
        %v1276 = vrcp.pop %v1268
        %v1277 = vrcp.pop %v1269
        %v1278 = vrcp.pop %v1270
        %v1279 = vrcp.pop %v1271
        %v1280 = vmul.f32 %v1144, %v1272
        %v1281 = vmul.f32 %v1145, %v1273
        %v1282 = vmul.f32 %v1146, %v1274
        %v1283 = vmul.f32 %v1147, %v1275
        %v1284 = vmul.f32 %v1148, %v1276
        %v1285 = vmul.f32 %v1149, %v1277
        %v1286 = vmul.f32 %v1150, %v1278
        %v1287 = vmul.f32 %v1151, %v1279
        %v1288 = vmul.f32 %v1280, %v969
        %v1289 = vmul.f32 %v1281, %v971
        %v1290 = vmul.f32 %v1282, %v973
        %v1291 = vmul.f32 %v1283, %v975
        %v1292 = vmul.f32 %v1284, %v977
        %v1293 = vmul.f32 %v1285, %v979
        %v1294 = vmul.f32 %v1286, %v981
        %v1295 = vmul.f32 %v1287, %v983
        %v1296 = vadd.f32 %v311, %v1288
        %v1297 = vadd.f32 %v312, %v1289
        %v1298 = vadd.f32 %v313, %v1290
        %v1299 = vadd.f32 %v314, %v1291
        %v1300 = vadd.f32 %v315, %v1292
        %v1301 = vadd.f32 %v316, %v1293
        %v1302 = vadd.f32 %v317, %v1294
        %v1303 = vadd.f32 %v318, %v1295
        %1304 = vst [vmem:[%s308] sm:$0xff] %v1296
        %1305 = vst [vmem:[%s308 + $0x8] sm:$0xff] %v1297
        %1306 = vst [vmem:[%s308 + $0x10] sm:$0xff] %v1298
        %1307 = vst [vmem:[%s308 + $0x18] sm:$0xff] %v1299
        %1308 = vst [vmem:[%s308 + $0x20] sm:$0xff] %v1300
        %1309 = vst [vmem:[%s308 + $0x28] sm:$0xff] %v1301
        %1310 = vst [vmem:[%s308 + $0x30] sm:$0xff] %v1302
        %1311 = vst [vmem:[%s308 + $0x38] sm:$0xff] %v1303
        %s1312 = sand.u32 %s149, 1
        %s1313 = scalar_lea.sflag [#allocation4], %s1312
        %s1314 = sand.u32 %s149, 1
        %s1315 = smul.addr %s1314, 64
        %s1316 = scalar_lea.vmem [#allocation10], %s1315
        // Predicated region
        $region57: #{tpu_custom_call.1} parent=39 // pred_check
          %p1317 = pneg %p159
        $region58: #{tpu_custom_call.1} parent=39 // pred_check_branch
          %1319 = sbr.rel (%p1317) target = $region60
        $region59: #{tpu_custom_call.1} parent=39 // pred_region
          %s1320 = smul.u32 8, %s26
          %s1322 = ssub.s32 1024, 1024
          %1323 = vsyncadd %s1313, %s1322
          %s1324 = smul.addr %s1320, 128
          %s1325 = scalar_lea.hbm %s5, %s1324
          %s1326 = sshll.u32 %s1316, 4
          %s1327 = int_to_ptr.vmem [resolvable:$true] %s1326
          %1332 = dma.vmem_to_hbm [thread:$0]  %s1327, 1024, %s1325, %s1313, 128, 128, 8
        $region60: #{tpu_custom_call.1} parent=39 // pred_fallthru
          _
      $region40: #{tpu_custom_call.1} parent=5 // pred_fallthru
        _
      %p1333 = scmp.le.s32.totalorder 2, %s21
      // Predicated region
      $region61: #{tpu_custom_call.1} parent=5 // pred_check
        %p1334 = pneg %p1333
      $region62: #{tpu_custom_call.1} parent=5 // pred_check_branch
        %1336 = sbr.rel (%p1334) target = $region64
      $region63: #{tpu_custom_call.1} parent=5 // pred_region
        %s1337 = ssub.s32 %s21, 2
        // Predicated region
        $region65: #{tpu_custom_call.1} parent=63 // pred_check
          %p1338 = pneg %p165
        $region66: #{tpu_custom_call.1} parent=63 // pred_check_branch
          %1340 = sbr.rel (%p1338) target = $region68
        $region67: #{tpu_custom_call.1} parent=63 // pred_region
          %s1341 = sand.u32 %s150, 1
          %s1342 = scalar_lea.sflag [#allocation4], %s1341
          %s1343 = sand.u32 %s150, 1
          %s1344 = smul.addr %s1343, 64
          %s1345 = scalar_lea.vmem [#allocation10], %s1344
          %1346 = dma.done %s1342, 1024
        $region68: #{tpu_custom_call.1} parent=63 // pred_fallthru
          _
      $region64: #{tpu_custom_call.1} parent=5 // pred_fallthru
        _
    $region6: #{tpu_custom_call.1} parent=1 // loop_footer
      %s25 = sadd.s32 1, %s21
    $region7: #{tpu_custom_call.1} parent=1 // loop_footer_branch
      %20 = sbr.rel target = $region3
    $region8: #{tpu_custom_call.1} parent=1 // loop_exit
      _
    %1347 = vsyncpa [#allocation3], 1
    %s1348 = scalar_lea.sflag [#allocation3], 1
    %1349 = vsyncpa %s1348, 1
    %1350 = vsyncpa [#allocation6], 1
    %s1351 = scalar_lea.sflag [#allocation6], 1
    %1352 = vsyncpa %s1351, 1
    %1353 = vsyncpa [#allocation9], 1
    %1354 = vsyncpa [#allocation4], 1
    %s1355 = scalar_lea.sflag [#allocation4], 1
    %1356 = vsyncpa %s1355, 1

// kernel: tpu_custom_call.1
$region0: #{tpu_custom_call.1}
  #allocation0 [shape = 'u32[]', space=smem, size = 0x4, offset = 0x4, fixed_abs, tag = 'smem constant byte address 0x4 - core index']
  #allocation1 [shape = 'u32[144,128]{1,0:T(1,128)}', space=vmem, size = 0x12000, scoped, tag = 'internal scratch']
  %s0 = inlined_call_operand.hbm [shape: f32[16,8,128], index: 0, kind: input, shape index: {}]
  %s1 = inlined_call_operand.hbm [shape: f32[16,128], index: 1, kind: input, shape index: {}]
  %s2 = inlined_call_operand.hbm [shape: f32[2,128,128], index: 2, kind: input, shape index: {}]
  %s3 = inlined_call_operand.vmem [shape: f32[2,128], index: 3, kind: input, shape index: {}]
  %s4 = inlined_call_operand.hbm [shape: f32[2,8,128], index: 4, kind: input, shape index: {}]
  %s5 = inlined_call_operand.hbm [shape: f32[16,8,128], index: 5, kind: output, shape index: {}]
  %s6 = sld [smem:[#allocation0]]
  $region69: #{tpu_custom_call.1} parent=0
    _
  %s8 = ssub.s32 1, %s6
  %s9 = scalar_select 0, %s8, %s6
  $region1: #{tpu_custom_call.1} parent=0
    #allocation2 [shape = 'u8[65536]{0}', space=vmem, size = 0x10000, scoped, tag = 'input window, operand 0']
    #allocation3 [shape = 's32[2]{0}', space=sflag, size = 0x8, scoped, tag = 'scoped memory for tpu_custom_call.1']
    #allocation4 [shape = 's32[2]{0}', space=sflag, size = 0x8, scoped, tag = 'scoped memory for tpu_custom_call.1']
    #allocation5 [shape = 'u8[8192]{0}', space=vmem, size = 0x2000, scoped, tag = 'input window, operand 1']
    #allocation6 [shape = 's32[2]{0}', space=sflag, size = 0x8, scoped, tag = 'scoped memory for tpu_custom_call.1']
    #allocation7 [shape = 'u8[131072]{0}', space=vmem, size = 0x20000, scoped, tag = 'input window, operand 2, single buffered']
    #allocation8 [shape = 'u8[8192]{0}', space=vmem, size = 0x2000, scoped, tag = 'input window, operand 4, single buffered']
    #allocation9 [shape = 's32[1]{0}', space=sflag, size = 0x4, scoped, tag = 'scoped memory for tpu_custom_call.1']
    #allocation10 [shape = 'u8[65536]{0}', space=vmem, size = 0x10000, scoped, tag = 'output window, operand 0']
    %10 = vsyncpa [#allocation3], 0
    %s11 = scalar_lea.sflag [#allocation3], 1
    %12 = vsyncpa %s11, 0
    %13 = vsyncpa [#allocation6], 0
    %s14 = scalar_lea.sflag [#allocation6], 1
    %15 = vsyncpa %s14, 0
    %16 = vsyncpa [#allocation9], 0
    %17 = vsyncpa [#allocation4], 0
    %s18 = scalar_lea.sflag [#allocation4], 1
    %19 = vsyncpa %s18, 0
    loop: start=0, step=1, limit=4
    $region2: #{tpu_custom_call.1} parent=1 // loop_pre_header
      _
    $region3: #{tpu_custom_call.1} parent=1 // loop_header
      %s21 = sphi 0, %s25
      %p22 = scmp.ge.s32.totalorder %s21, 4
      %s31 = sphi 0, %s33
      %s34 = sphi 0, %s31
      %s35 = sphi 0, %s34
      %s51 = sphi 0, %s35
      %s57 = sphi 0, %s59
      %s60 = sphi 0, %s57
      %s61 = sphi 0, %s60
      %s77 = sphi 0, %s61
      %s81 = sphi 0, %s81
      %s83 = sphi 0, %s81
      %s84 = sphi 0, %s83
      %s98 = sphi 0, %s84
      %s102 = sphi 0, %s102
      %s104 = sphi 0, %s102
      %s105 = sphi 0, %s104
      %s119 = sphi 0, %s105
      %s123 = sphi 0, %s123
      %s125 = sphi 0, %s123
      %s126 = sphi 0, %s125
      %s140 = sphi 0, %s126
      %s146 = sphi 0, %s148
      %s149 = sphi 0, %s146
      %s150 = sphi 0, %s149
      %s166 = sphi 0, %s150
    $region4: #{tpu_custom_call.1} parent=1 // loop_header_branch
      %24 = sbr.rel (%p22) target = $region8
    $region5: #{tpu_custom_call.1} parent=1 // loop_body
      %s26 = ssub.s32 %s21, 1
      %s27 = ssub.s32 %s21, 2
      %s28 = sadd.s32 %s21, 1
      %s29 = ssub.s32 %s21, %s28
      %p30 = scmp.eq.s32.totalorder %s29, 0
      %s32 = sadd.s32 %s31, 1
      %s33 = scalar_select %p30, %s31, %s32
      %p36 = pneg %p30
      %p37 = scmp.eq.s32.totalorder %s21, 1
      %p38 = por %p36, %p37
      %p39 = scmp.ne.s32.totalorder %s31, %s34
      %p40 = scmp.eq.s32.totalorder %s21, 0
      %p41 = por %p39, %p40
      %p42 = scmp.ne.s32.totalorder %s31, %s34
      %p43 = scmp.eq.s32.totalorder %s26, 1
      %p44 = por %p42, %p43
      %p45 = scmp.ne.s32.totalorder %s34, %s35
      %p46 = scmp.eq.s32.totalorder %s26, 0
      %p47 = por %p45, %p46
      %p48 = scmp.ne.s32.totalorder %s34, %s35
      %p49 = scmp.eq.s32.totalorder %s27, 1
      %p50 = por %p48, %p49
      %p52 = scmp.ne.s32.totalorder %s35, %s51
      %p53 = scmp.eq.s32.totalorder %s27, 0
      %p54 = por %p52, %p53
      %s55 = ssub.s32 %s21, %s28
      %p56 = scmp.eq.s32.totalorder %s55, 0
      %s58 = sadd.s32 %s57, 1
      %s59 = scalar_select %p56, %s57, %s58
      %p62 = pneg %p56
      %p63 = scmp.eq.s32.totalorder %s21, 1
      %p64 = por %p62, %p63
      %p65 = scmp.ne.s32.totalorder %s57, %s60
      %p66 = scmp.eq.s32.totalorder %s21, 0
      %p67 = por %p65, %p66
      %p68 = scmp.ne.s32.totalorder %s57, %s60
      %p69 = scmp.eq.s32.totalorder %s26, 1
      %p70 = por %p68, %p69
      %p71 = scmp.ne.s32.totalorder %s60, %s61
      %p72 = scmp.eq.s32.totalorder %s26, 0
      %p73 = por %p71, %p72
      %p74 = scmp.ne.s32.totalorder %s60, %s61
      %p75 = scmp.eq.s32.totalorder %s27, 1
      %p76 = por %p74, %p75
      %p78 = scmp.ne.s32.totalorder %s61, %s77
      %p79 = scmp.eq.s32.totalorder %s27, 0
      %p80 = por %p78, %p79
      %s82 = sadd.s32 %s81, 1
      %p85 = scmp.eq.s32.totalorder %s21, 1
      %p86 = scmp.ne.s32.totalorder %s81, %s83
      %p87 = scmp.eq.s32.totalorder %s21, 0
      %p88 = por %p86, %p87
      %p89 = scmp.ne.s32.totalorder %s81, %s83
      %p90 = scmp.eq.s32.totalorder %s26, 1
      %p91 = por %p89, %p90
      %p92 = scmp.ne.s32.totalorder %s83, %s84
      %p93 = scmp.eq.s32.totalorder %s26, 0
      %p94 = por %p92, %p93
      %p95 = scmp.ne.s32.totalorder %s83, %s84
      %p96 = scmp.eq.s32.totalorder %s27, 1
      %p97 = por %p95, %p96
      %p99 = scmp.ne.s32.totalorder %s84, %s98
      %p100 = scmp.eq.s32.totalorder %s27, 0
      %p101 = por %p99, %p100
      %s103 = sadd.s32 %s102, 1
      %p106 = scmp.eq.s32.totalorder %s21, 1
      %p107 = scmp.ne.s32.totalorder %s102, %s104
      %p108 = scmp.eq.s32.totalorder %s21, 0
      %p109 = por %p107, %p108
      %p110 = scmp.ne.s32.totalorder %s102, %s104
      %p111 = scmp.eq.s32.totalorder %s26, 1
      %p112 = por %p110, %p111
      %p113 = scmp.ne.s32.totalorder %s104, %s105
      %p114 = scmp.eq.s32.totalorder %s26, 0
      %p115 = por %p113, %p114
      %p116 = scmp.ne.s32.totalorder %s104, %s105
      %p117 = scmp.eq.s32.totalorder %s27, 1
      %p118 = por %p116, %p117
      %p120 = scmp.ne.s32.totalorder %s105, %s119
      %p121 = scmp.eq.s32.totalorder %s27, 0
      %p122 = por %p120, %p121
      %s124 = sadd.s32 %s123, 1
      %p127 = scmp.eq.s32.totalorder %s21, 1
      %p128 = scmp.ne.s32.totalorder %s123, %s125
      %p129 = scmp.eq.s32.totalorder %s21, 0
      %p130 = por %p128, %p129
      %p131 = scmp.ne.s32.totalorder %s123, %s125
      %p132 = scmp.eq.s32.totalorder %s26, 1
      %p133 = por %p131, %p132
      %p134 = scmp.ne.s32.totalorder %s125, %s126
      %p135 = scmp.eq.s32.totalorder %s26, 0
      %p136 = por %p134, %p135
      %p137 = scmp.ne.s32.totalorder %s125, %s126
      %p138 = scmp.eq.s32.totalorder %s27, 1
      %p139 = por %p137, %p138
      %p141 = scmp.ne.s32.totalorder %s126, %s140
      %p142 = scmp.eq.s32.totalorder %s27, 0
      %p143 = por %p141, %p142
      %s144 = ssub.s32 %s21, %s28
      %p145 = scmp.eq.s32.totalorder %s144, 0
      %s147 = sadd.s32 %s146, 1
      %s148 = scalar_select %p145, %s146, %s147
      %p151 = pneg %p145
      %p152 = scmp.eq.s32.totalorder %s21, 1
      %p153 = por %p151, %p152
      %p154 = scmp.ne.s32.totalorder %s146, %s149
      %p155 = scmp.eq.s32.totalorder %s21, 0
      %p156 = por %p154, %p155
      %p157 = scmp.ne.s32.totalorder %s146, %s149
      %p158 = scmp.eq.s32.totalorder %s26, 1
      %p159 = por %p157, %p158
      %p160 = scmp.ne.s32.totalorder %s149, %s150
      %p161 = scmp.eq.s32.totalorder %s26, 0
      %p162 = por %p160, %p161
      %p163 = scmp.ne.s32.totalorder %s149, %s150
      %p164 = scmp.eq.s32.totalorder %s27, 1
      %p165 = por %p163, %p164
      %p167 = scmp.ne.s32.totalorder %s150, %s166
      %p168 = scmp.eq.s32.totalorder %s27, 0
      %p169 = por %p167, %p168
      %p170 = scmp.le.s32.totalorder 1, %s21
      %p171 = scmp.lt.s32.totalorder %s21, 3
      %p172 = pnand %p170, %p171
      %p173 = pneg %p172
      // Predicated region
      $region9: #{tpu_custom_call.1} parent=5 // pred_check
        _
      $region10: #{tpu_custom_call.1} parent=5 // pred_check_branch
        %175 = sbr.rel (%p172) target = $region12
      $region11: #{tpu_custom_call.1} parent=5 // pred_region
        %s176 = ssub.s32 %s21, 1
        // Predicated region
        $region13: #{tpu_custom_call.1} parent=11 // pred_check
          %p177 = pneg %p94
        $region14: #{tpu_custom_call.1} parent=11 // pred_check_branch
          %179 = sbr.rel (%p177) target = $region16
        $region15: #{tpu_custom_call.1} parent=11 // pred_region
          %s181 = ssub.s32 4096, 4096
          %182 = vsyncadd [#allocation6], %s181
          %s183 = sshll.u32 [#allocation7], 4
          %s184 = int_to_ptr.vmem [resolvable:$true] %s183
          %189 = dma.hbm_to_vmem [thread:$0]  %s2, 4096, %s184, [#allocation6], 128, 128, 8
        $region16: #{tpu_custom_call.1} parent=11 // pred_fallthru
          _
        // Predicated region
        $region17: #{tpu_custom_call.1} parent=11 // pred_check
          %p190 = pneg %p115
        $region18: #{tpu_custom_call.1} parent=11 // pred_check_branch
          %192 = sbr.rel (%p190) target = $region20
        $region19: #{tpu_custom_call.1} parent=11 // pred_region
          _
        $region20: #{tpu_custom_call.1} parent=11 // pred_fallthru
          _
        // Predicated region
        $region21: #{tpu_custom_call.1} parent=11 // pred_check
          %p193 = pneg %p136
        $region22: #{tpu_custom_call.1} parent=11 // pred_check_branch
          %195 = sbr.rel (%p193) target = $region24
        $region23: #{tpu_custom_call.1} parent=11 // pred_region
          %s197 = ssub.s32 256, 256
          %198 = vsyncadd [#allocation9], %s197
          %s199 = sshll.u32 [#allocation8], 4
          %s200 = int_to_ptr.vmem [resolvable:$true] %s199
          %205 = dma.hbm_to_vmem [thread:$0]  %s4, 256, %s200, [#allocation9], 128, 128, 8
        $region24: #{tpu_custom_call.1} parent=11 // pred_fallthru
          _
      $region12: #{tpu_custom_call.1} parent=5 // pred_fallthru
        _
      %p206 = scmp.lt.s32.totalorder %s21, 2
      // Predicated region
      $region25: #{tpu_custom_call.1} parent=5 // pred_check
        %p207 = pneg %p206
      $region26: #{tpu_custom_call.1} parent=5 // pred_check_branch
        %209 = sbr.rel (%p207) target = $region28
      $region27: #{tpu_custom_call.1} parent=5 // pred_region
        // Predicated region
        $region29: #{tpu_custom_call.1} parent=27 // pred_check
          %p210 = pneg %p41
        $region30: #{tpu_custom_call.1} parent=27 // pred_check_branch
          %212 = sbr.rel (%p210) target = $region32
        $region31: #{tpu_custom_call.1} parent=27 // pred_region
          %s213 = sand.u32 %s31, 1
          %s214 = scalar_lea.sflag [#allocation3], %s213
          %s215 = sand.u32 %s31, 1
          %s216 = smul.addr %s215, 64
          %s217 = scalar_lea.vmem [#allocation2], %s216
          %s218 = smul.u32 8, %s21
          %s220 = ssub.s32 1024, 1024
          %221 = vsyncadd %s214, %s220
          %s222 = smul.addr %s218, 128
          %s223 = scalar_lea.hbm %s0, %s222
          %s224 = sshll.u32 %s217, 4
          %s225 = int_to_ptr.vmem [resolvable:$true] %s224
          %230 = dma.hbm_to_vmem [thread:$0]  %s223, 1024, %s225, %s214, 128, 128, 8
        $region32: #{tpu_custom_call.1} parent=27 // pred_fallthru
          _
        // Predicated region
        $region33: #{tpu_custom_call.1} parent=27 // pred_check
          %p231 = pneg %p67
        $region34: #{tpu_custom_call.1} parent=27 // pred_check_branch
          %233 = sbr.rel (%p231) target = $region36
        $region35: #{tpu_custom_call.1} parent=27 // pred_region
          %s234 = sand.u32 %s21, 1
          %s235 = scalar_lea.sflag [#allocation6], %s234
          %s236 = sand.u32 %s57, 1
          %s237 = smul.addr %s236, 8
          %s238 = scalar_lea.vmem [#allocation5], %s237
          %s240 = ssub.s32 128, 128
          %241 = vsyncadd %s235, %s240
          %s242 = smul.addr %s21, 128
          %s243 = scalar_lea.hbm %s1, %s242
          %s245 = sshll.u32 %s238, 4
          %s246 = int_to_ptr.vmem [resolvable:$true] %s245
          %248 = dma.hbm_to_vmem [thread:$0]  %s243, 128, %s246, %s235
        $region36: #{tpu_custom_call.1} parent=27 // pred_fallthru
          _
      $region28: #{tpu_custom_call.1} parent=5 // pred_fallthru
        _
      %p249 = scmp.le.s32.totalorder 1, %s21
      %p250 = scmp.lt.s32.totalorder %s21, 3
      %p251 = pnand %p249, %p250
      %p252 = pneg %p251
      // Predicated region
      $region37: #{tpu_custom_call.1} parent=5 // pred_check
        _
      $region38: #{tpu_custom_call.1} parent=5 // pred_check_branch
        %254 = sbr.rel (%p251) target = $region40
      $region39: #{tpu_custom_call.1} parent=5 // pred_region
        %s255 = ssub.s32 %s21, 1
        %s256 = sand.u32 %s34, 1
        %s257 = scalar_lea.sflag [#allocation3], %s256
        %s258 = sand.u32 %s34, 1
        %s259 = smul.addr %s258, 64
        %s260 = scalar_lea.vmem [#allocation2], %s259
        // Predicated region
        $region41: #{tpu_custom_call.1} parent=39 // pred_check
          %p261 = pneg %p47
        $region42: #{tpu_custom_call.1} parent=39 // pred_check_branch
          %263 = sbr.rel (%p261) target = $region44
        $region43: #{tpu_custom_call.1} parent=39 // pred_region
          %264 = dma.done %s257, 1024
        $region44: #{tpu_custom_call.1} parent=39 // pred_fallthru
          _
        %s265 = sand.u32 %s26, 1
        %s266 = scalar_lea.sflag [#allocation6], %s265
        %s267 = sand.u32 %s60, 1
        %s268 = smul.addr %s267, 8
        %s269 = scalar_lea.vmem [#allocation5], %s268
        // Predicated region
        $region45: #{tpu_custom_call.1} parent=39 // pred_check
          %p270 = pneg %p73
        $region46: #{tpu_custom_call.1} parent=39 // pred_check_branch
          %272 = sbr.rel (%p270) target = $region48
        $region47: #{tpu_custom_call.1} parent=39 // pred_region
          %273 = dma.done %s266, 128
        $region48: #{tpu_custom_call.1} parent=39 // pred_fallthru
          _
        // Predicated region
        $region49: #{tpu_custom_call.1} parent=39 // pred_check
          %p274 = pneg %p94
        $region50: #{tpu_custom_call.1} parent=39 // pred_check_branch
          %276 = sbr.rel (%p274) target = $region52
        $region51: #{tpu_custom_call.1} parent=39 // pred_region
          %277 = dma.done [#allocation6], 4096
        $region52: #{tpu_custom_call.1} parent=39 // pred_fallthru
          _
        // Predicated region
        $region53: #{tpu_custom_call.1} parent=39 // pred_check
          %p278 = pneg %p136
        $region54: #{tpu_custom_call.1} parent=39 // pred_check_branch
          %280 = sbr.rel (%p278) target = $region56
        $region55: #{tpu_custom_call.1} parent=39 // pred_region
          %281 = dma.done [#allocation9], 256
        $region56: #{tpu_custom_call.1} parent=39 // pred_fallthru
          _
        %s282 = sand.u32 %s34, 1
        %s283 = scalar_lea.sflag [#allocation3], %s282
        %s284 = sand.u32 %s34, 1
        %s285 = smul.addr %s284, 64
        %s286 = scalar_lea.vmem [#allocation2], %s285
        %p287 = pneg %p47
        %p288 = pneg %p44
        %s289 = sand.u32 %s26, 1
        %s290 = scalar_lea.sflag [#allocation6], %s289
        %s291 = sand.u32 %s60, 1
        %s292 = smul.addr %s291, 8
        %s293 = scalar_lea.vmem [#allocation5], %s292
        %p294 = pneg %p73
        %p295 = pneg %p70
        %p296 = pneg %p94
        %p297 = pneg %p91
        %p298 = pneg %p115
        %p299 = pneg %p112
        %p300 = pneg %p136
        %p301 = pneg %p133
        %p302 = pneg %p162
        %p303 = pneg %p159
        %s304 = sand.u32 %s149, 1
        %s305 = scalar_lea.sflag [#allocation4], %s304
        %s306 = sand.u32 %s149, 1
        %s307 = smul.addr %s306, 64
        %s308 = scalar_lea.vmem [#allocation10], %s307
        %s309 = smul.u32 8, %s26
        %s310 = smul.u32 8, %s26
        %v311 = vld [vmem:[%s260] sm:$0xff]
        %v312 = vld [vmem:[%s260 + $0x8] sm:$0xff]
        %v313 = vld [vmem:[%s260 + $0x10] sm:$0xff]
        %v314 = vld [vmem:[%s260 + $0x18] sm:$0xff]
        %v315 = vld [vmem:[%s260 + $0x20] sm:$0xff]
        %v316 = vld [vmem:[%s260 + $0x28] sm:$0xff]
        %v317 = vld [vmem:[%s260 + $0x30] sm:$0xff]
        %v318 = vld [vmem:[%s260 + $0x38] sm:$0xff]
        %v319 = vld [vmem:[#allocation7] sm:$0xff]
        %v320 = vld [vmem:[#allocation7 + $0x8] sm:$0xff]
        %v321 = vld [vmem:[#allocation7 + $0x10] sm:$0xff]
        %v322 = vld [vmem:[#allocation7 + $0x18] sm:$0xff]
        %v323 = vld [vmem:[#allocation7 + $0x20] sm:$0xff]
        %v324 = vld [vmem:[#allocation7 + $0x28] sm:$0xff]
        %v325 = vld [vmem:[#allocation7 + $0x30] sm:$0xff]
        %v326 = vld [vmem:[#allocation7 + $0x38] sm:$0xff]
        %v327 = vld [vmem:[#allocation7 + $0x40] sm:$0xff]
        %v328 = vld [vmem:[#allocation7 + $0x48] sm:$0xff]
        %v329 = vld [vmem:[#allocation7 + $0x50] sm:$0xff]
        %v330 = vld [vmem:[#allocation7 + $0x58] sm:$0xff]
        %v331 = vld [vmem:[#allocation7 + $0x60] sm:$0xff]
        %v332 = vld [vmem:[#allocation7 + $0x68] sm:$0xff]
        %v333 = vld [vmem:[#allocation7 + $0x70] sm:$0xff]
        %v334 = vld [vmem:[#allocation7 + $0x78] sm:$0xff]
        %335 = vmatprep.subr.mxu0 0.0
        %336 = vmatpush1.msra.mxu0 %v334
        %337 = vmatprep.subr.mxu0 0.0
        %338 = vmatpush1.msra.mxu0 %v333
        %339 = vmatprep.subr.mxu0 0.0
        %340 = vmatpush1.msra.mxu0 %v332
        %341 = vmatprep.subr.mxu0 0.0
        %342 = vmatpush1.msra.mxu0 %v331
        %343 = vmatprep.subr.mxu0 0.0
        %344 = vmatpush1.msra.mxu0 %v330
        %345 = vmatprep.subr.mxu0 0.0
        %346 = vmatpush1.msra.mxu0 %v329
        %347 = vmatprep.subr.mxu0 0.0
        %348 = vmatpush1.msra.mxu0 %v328
        %349 = vmatprep.subr.mxu0 0.0
        %350 = vmatpush1.msra.mxu0 %v327
        %351 = vmatprep.subr.mxu0 0.0
        %352 = vmatpush1.msra.mxu0 %v326
        %353 = vmatprep.subr.mxu0 0.0
        %354 = vmatpush1.msra.mxu0 %v325
        %355 = vmatprep.subr.mxu0 0.0
        %356 = vmatpush1.msra.mxu0 %v324
        %357 = vmatprep.subr.mxu0 0.0
        %358 = vmatpush1.msra.mxu0 %v323
        %359 = vmatprep.subr.mxu0 0.0
        %360 = vmatpush1.msra.mxu0 %v322
        %361 = vmatprep.subr.mxu0 0.0
        %362 = vmatpush1.msra.mxu0 %v321
        %363 = vmatprep.subr.mxu0 0.0
        %364 = vmatpush1.msra.mxu0 %v320
        %365 = vmatprep.subr.mxu0 0.0
        %366 = vmatpush1.msra.mxu0 %v319
        %367 = vmatprep.subr.mxu0 0.0
        %368 = vmatpush2.msra.mxu0 0.0
        %369 = vmatprep.subr.mxu0 0.0
        %370 = vmatpush2.msra.mxu0 0.0
        %371 = vmatprep.subr.mxu0 0.0
        %372 = vmatpush2.msra.mxu0 0.0
        %373 = vmatprep.subr.mxu0 0.0
        %374 = vmatpush2.msra.mxu0 0.0
        %375 = vmatprep.subr.mxu0 0.0
        %376 = vmatpush2.msra.mxu0 0.0
        %377 = vmatprep.subr.mxu0 0.0
        %378 = vmatpush2.msra.mxu0 0.0
        %379 = vmatprep.subr.mxu0 0.0
        %380 = vmatpush2.msra.mxu0 0.0
        %381 = vmatprep.subr.mxu0 0.0
        %382 = vmatpush2.msra.mxu0 0.0
        %383 = vmatprep.subr.mxu0 0.0
        %384 = vmatpush2.msra.mxu0 0.0
        %385 = vmatprep.subr.mxu0 0.0
        %386 = vmatpush2.msra.mxu0 0.0
        %387 = vmatprep.subr.mxu0 0.0
        %388 = vmatpush2.msra.mxu0 0.0
        %389 = vmatprep.subr.mxu0 0.0
        %390 = vmatpush2.msra.mxu0 0.0
        %391 = vmatprep.subr.mxu0 0.0
        %392 = vmatpush2.msra.mxu0 0.0
        %393 = vmatprep.subr.mxu0 0.0
        %394 = vmatpush2.msra.mxu0 0.0
        %395 = vmatprep.subr.mxu0 0.0
        %396 = vmatpush2.msra.mxu0 0.0
        %397 = vmatprep.subr.mxu0 0.0
        %398 = vmatpush2.msra.mxu0 0.0
        %399 = vmatprep.mubr.f32.mxu0 0.0
        %400 = vmatmul.mubr.f32.gmra.mxu0 %v311
        %v401 = vpop.f32.mrf.mxu0
        %v402 = vadd.f32 0.0, %v401
        %v403 = vpop.f32.mrf.mxu0
        %404 = vmatprep.mubr.f32.mxu0 0.0
        %405 = vmatmul.mubr.f32.gmra.mxu0 %v312
        %v406 = vpop.f32.mrf.mxu0
        %v407 = vadd.f32 0.0, %v406
        %v408 = vpop.f32.mrf.mxu0
        %409 = vmatprep.mubr.f32.mxu0 0.0
        %410 = vmatmul.mubr.f32.gmra.mxu0 %v313
        %v411 = vpop.f32.mrf.mxu0
        %v412 = vadd.f32 0.0, %v411
        %v413 = vpop.f32.mrf.mxu0
        %414 = vmatprep.mubr.f32.mxu0 0.0
        %415 = vmatmul.mubr.f32.gmra.mxu0 %v314
        %v416 = vpop.f32.mrf.mxu0
        %v417 = vadd.f32 0.0, %v416
        %v418 = vpop.f32.mrf.mxu0
        %419 = vmatprep.mubr.f32.mxu0 0.0
        %420 = vmatmul.mubr.f32.gmra.mxu0 %v315
        %v421 = vpop.f32.mrf.mxu0
        %v422 = vadd.f32 0.0, %v421
        %v423 = vpop.f32.mrf.mxu0
        %424 = vmatprep.mubr.f32.mxu0 0.0
        %425 = vmatmul.mubr.f32.gmra.mxu0 %v316
        %v426 = vpop.f32.mrf.mxu0
        %v427 = vadd.f32 0.0, %v426
        %v428 = vpop.f32.mrf.mxu0
        %429 = vmatprep.mubr.f32.mxu0 0.0
        %430 = vmatmul.mubr.f32.gmra.mxu0 %v317
        %v431 = vpop.f32.mrf.mxu0
        %v432 = vadd.f32 0.0, %v431
        %v433 = vpop.f32.mrf.mxu0
        %434 = vmatprep.mubr.f32.mxu0 0.0
        %435 = vmatmul.mubr.f32.gmra.mxu0 %v318
        %v436 = vpop.f32.mrf.mxu0
        %v437 = vadd.f32 0.0, %v436
        %v438 = vpop.f32.mrf.mxu0
        %439 = vdwg.mxu0
        %v440 = vld [vmem:[#allocation8] sm:$0xff]
        %v441 = vmul.f32 %v402, %v440
        %v442 = vmul.f32 %v407, %v440
        %v443 = vmul.f32 %v412, %v440
        %v444 = vmul.f32 %v417, %v440
        %v445 = vmul.f32 %v422, %v440
        %v446 = vmul.f32 %v427, %v440
        %v447 = vmul.f32 %v432, %v440
        %v448 = vmul.f32 %v437, %v440
        %s449 = scalar_lea.vmem [#allocation8], 8
        %v450 = vld [vmem:[%s449] sm:$0xff]
        %v451 = vadd.f32 %v441, %v450
        %v452 = vadd.f32 %v442, %v450
        %v453 = vadd.f32 %v443, %v450
        %v454 = vadd.f32 %v444, %v450
        %v455 = vadd.f32 %v445, %v450
        %v456 = vadd.f32 %v446, %v450
        %v457 = vadd.f32 %v447, %v450
        %v458 = vadd.f32 %v448, %v450
        %v459 = vtanh.pop %v451
        %v460 = vtanh.pop %v452
        %v461 = vtanh.pop %v453
        %v462 = vtanh.pop %v454
        %v463 = vtanh.pop %v455
        %v464 = vtanh.pop %v456
        %v465 = vtanh.pop %v457
        %v466 = vtanh.pop %v458
        %v467 = vld [vmem:[%s269] sm:$0xff]
        %s468 = scalar_lea.vmem [#allocation7], 128
        %v469 = vld [vmem:[%s468] sm:$0xff]
        %v470 = vld [vmem:[%s468 + $0x8] sm:$0xff]
        %v471 = vld [vmem:[%s468 + $0x10] sm:$0xff]
        %v472 = vld [vmem:[%s468 + $0x18] sm:$0xff]
        %v473 = vld [vmem:[%s468 + $0x20] sm:$0xff]
        %v474 = vld [vmem:[%s468 + $0x28] sm:$0xff]
        %v475 = vld [vmem:[%s468 + $0x30] sm:$0xff]
        %v476 = vld [vmem:[%s468 + $0x38] sm:$0xff]
        %v477 = vld [vmem:[%s468 + $0x40] sm:$0xff]
        %v478 = vld [vmem:[%s468 + $0x48] sm:$0xff]
        %v479 = vld [vmem:[%s468 + $0x50] sm:$0xff]
        %v480 = vld [vmem:[%s468 + $0x58] sm:$0xff]
        %v481 = vld [vmem:[%s468 + $0x60] sm:$0xff]
        %v482 = vld [vmem:[%s468 + $0x68] sm:$0xff]
        %v483 = vld [vmem:[%s468 + $0x70] sm:$0xff]
        %v484 = vld [vmem:[%s468 + $0x78] sm:$0xff]
        %v485 = vld [vmem:[%s3] sm:$0x1]
        %v486 = vlaneseq
        %v487 = vshrl.u32 %v486, 7
        %v488 = vsub.s32 0, %v487
        %v489 = vrot.slane %v485, %v488
        %490 = vmatprep.subr.mxu0 0.0
        %491 = vmatpush1.msra.mxu0 %v484
        %492 = vmatprep.subr.mxu0 0.0
        %493 = vmatpush1.msra.mxu0 %v483
        %494 = vmatprep.subr.mxu0 0.0
        %495 = vmatpush1.msra.mxu0 %v482
        %496 = vmatprep.subr.mxu0 0.0
        %497 = vmatpush1.msra.mxu0 %v481
        %498 = vmatprep.subr.mxu0 0.0
        %499 = vmatpush1.msra.mxu0 %v480
        %500 = vmatprep.subr.mxu0 0.0
        %501 = vmatpush1.msra.mxu0 %v479
        %502 = vmatprep.subr.mxu0 0.0
        %503 = vmatpush1.msra.mxu0 %v478
        %504 = vmatprep.subr.mxu0 0.0
        %505 = vmatpush1.msra.mxu0 %v477
        %506 = vmatprep.subr.mxu0 0.0
        %507 = vmatpush1.msra.mxu0 %v476
        %508 = vmatprep.subr.mxu0 0.0
        %509 = vmatpush1.msra.mxu0 %v475
        %510 = vmatprep.subr.mxu0 0.0
        %511 = vmatpush1.msra.mxu0 %v474
        %512 = vmatprep.subr.mxu0 0.0
        %513 = vmatpush1.msra.mxu0 %v473
        %514 = vmatprep.subr.mxu0 0.0
        %515 = vmatpush1.msra.mxu0 %v472
        %516 = vmatprep.subr.mxu0 0.0
        %517 = vmatpush1.msra.mxu0 %v471
        %518 = vmatprep.subr.mxu0 0.0
        %519 = vmatpush1.msra.mxu0 %v470
        %520 = vmatprep.subr.mxu0 0.0
        %521 = vmatpush1.msra.mxu0 %v469
        %522 = vmatprep.subr.mxu0 0.0
        %523 = vmatpush2.msra.mxu0 0.0
        %524 = vmatprep.subr.mxu0 0.0
        %525 = vmatpush2.msra.mxu0 0.0
        %526 = vmatprep.subr.mxu0 0.0
        %527 = vmatpush2.msra.mxu0 0.0
        %528 = vmatprep.subr.mxu0 0.0
        %529 = vmatpush2.msra.mxu0 0.0
        %530 = vmatprep.subr.mxu0 0.0
        %531 = vmatpush2.msra.mxu0 0.0
        %532 = vmatprep.subr.mxu0 0.0
        %533 = vmatpush2.msra.mxu0 0.0
        %534 = vmatprep.subr.mxu0 0.0
        %535 = vmatpush2.msra.mxu0 0.0
        %536 = vmatprep.subr.mxu0 0.0
        %537 = vmatpush2.msra.mxu0 0.0
        %538 = vmatprep.subr.mxu0 0.0
        %539 = vmatpush2.msra.mxu0 0.0
        %540 = vmatprep.subr.mxu0 0.0
        %541 = vmatpush2.msra.mxu0 0.0
        %542 = vmatprep.subr.mxu0 0.0
        %543 = vmatpush2.msra.mxu0 0.0
        %544 = vmatprep.subr.mxu0 0.0
        %545 = vmatpush2.msra.mxu0 0.0
        %546 = vmatprep.subr.mxu0 0.0
        %547 = vmatpush2.msra.mxu0 0.0
        %548 = vmatprep.subr.mxu0 0.0
        %549 = vmatpush2.msra.mxu0 0.0
        %550 = vmatprep.subr.mxu0 0.0
        %551 = vmatpush2.msra.mxu0 0.0
        %552 = vmatprep.subr.mxu0 0.0
        %553 = vmatpush2.msra.mxu0 0.0
        %554 = vmatprep.mubr.f32.mxu0 0.0
        %555 = vmatmul.mubr.f32.gmra.mxu0 %v467
        %v556 = vpop.f32.mrf.mxu0
        %v557 = vadd.f32 %v489, %v556
        %v558 = vpop.f32.mrf.mxu0
        %559 = vdwg.mxu0
        %v560 = vtanh.pop %v557
        %v562 = vcombine.high %v560, %v560
        %v564 = vunpack.c.l.s4 1966171168
        %v565 = vunpack.c.0.s8 %v564
        %v566 = vlaneseq
        %v567 = vshrl.u32 %v566, 7
        %v568 = vsub.s32 %v565, %v567
        %v569 = vrot.slane %v560, %v568
        %v571 = vunpack.c.l.s4 1966171168
        %v572 = vunpack.c.0.s8 %v571
        %v573 = vlaneseq
        %v574 = vshrl.u32 %v573, 7
        %v575 = vsub.s32 %v572, %v574
        %v576 = vrot.slane %v562, %v575
        %v577 = vcombine.high %v569, %v569
        %v578 = vcombine.high %v576, %v576
        %v580 = vunpack.c.l.s4 1966171168
        %v581 = vunpack.c.0.s8 %v580
        %v582 = vlaneseq
        %v583 = vshrl.u32 %v582, 7
        %v584 = vsub.s32 %v581, %v583
        %v585 = vrot.slane %v569, %v584
        %v587 = vunpack.c.l.s4 1966171168
        %v588 = vunpack.c.0.s8 %v587
        %v589 = vlaneseq
        %v590 = vshrl.u32 %v589, 7
        %v591 = vsub.s32 %v588, %v590
        %v592 = vrot.slane %v576, %v591
        %v594 = vunpack.c.l.s4 1966171168
        %v595 = vunpack.c.0.s8 %v594
        %v596 = vlaneseq
        %v597 = vshrl.u32 %v596, 7
        %v598 = vsub.s32 %v595, %v597
        %v599 = vrot.slane %v577, %v598
        %v601 = vunpack.c.l.s4 1966171168
        %v602 = vunpack.c.0.s8 %v601
        %v603 = vlaneseq
        %v604 = vshrl.u32 %v603, 7
        %v605 = vsub.s32 %v602, %v604
        %v606 = vrot.slane %v578, %v605
        %v607 = vcombine.high %v585, %v585
        %v608 = vcombine.high %v592, %v592
        %v609 = vcombine.high %v599, %v599
        %v610 = vcombine.high %v606, %v606
        %v611 = vlaneseq
        %v612 = vshrl.u32 %v611, 7
        %v613 = vsub.s32 0, %v612
        %v614 = vrot.slane %v585, %v613
        %v615 = vlaneseq
        %v616 = vshrl.u32 %v615, 7
        %v617 = vsub.s32 0, %v616
        %v618 = vrot.slane %v599, %v617
        %v619 = vlaneseq
        %v620 = vshrl.u32 %v619, 7
        %v621 = vsub.s32 0, %v620
        %v622 = vrot.slane %v607, %v621
        %v623 = vlaneseq
        %v624 = vshrl.u32 %v623, 7
        %v625 = vsub.s32 0, %v624
        %v626 = vrot.slane %v609, %v625
        %v627 = vlaneseq
        %v628 = vshrl.u32 %v627, 7
        %v629 = vsub.s32 0, %v628
        %v630 = vrot.slane %v592, %v629
        %v631 = vlaneseq
        %v632 = vshrl.u32 %v631, 7
        %v633 = vsub.s32 0, %v632
        %v634 = vrot.slane %v606, %v633
        %v635 = vlaneseq
        %v636 = vshrl.u32 %v635, 7
        %v637 = vsub.s32 0, %v636
        %v638 = vrot.slane %v608, %v637
        %v639 = vlaneseq
        %v640 = vshrl.u32 %v639, 7
        %v641 = vsub.s32 0, %v640
        %v642 = vrot.slane %v610, %v641
        %v651 = vmul.f32 %v459, %v614
        %v652 = vmul.f32 %v460, %v618
        %v653 = vmul.f32 %v461, %v622
        %v654 = vmul.f32 %v462, %v626
        %v655 = vmul.f32 %v463, %v630
        %v656 = vmul.f32 %v464, %v634
        %v657 = vmul.f32 %v465, %v638
        %v658 = vmul.f32 %v466, %v642
        %v659 = vld [vmem:[%s3 + $0x1] sm:$0x1]
        %v660 = vlaneseq
        %v661 = vshrl.u32 %v660, 7
        %v662 = vsub.s32 0, %v661
        %v663 = vrot.slane %v659, %v662
        %v664 = vmul.f32 %v651, %v663
        %v665 = vmul.f32 %v652, %v663
        %v666 = vmul.f32 %v653, %v663
        %v667 = vmul.f32 %v654, %v663
        %v668 = vmul.f32 %v655, %v663
        %v669 = vmul.f32 %v656, %v663
        %v670 = vmul.f32 %v657, %v663
        %v671 = vmul.f32 %v658, %v663
        %672 = vadd.xlane.f32.xlu0 %v664
        %v673 = vpop.xlane.xlu0 %672
        %674 = vadd.xlane.f32.xlu0 %v665
        %v675 = vpop.xlane.xlu0 %674
        %676 = vadd.xlane.f32.xlu0 %v666
        %v677 = vpop.xlane.xlu0 %676
        %678 = vadd.xlane.f32.xlu0 %v667
        %v679 = vpop.xlane.xlu0 %678
        %680 = vadd.xlane.f32.xlu0 %v668
        %v681 = vpop.xlane.xlu0 %680
        %682 = vadd.xlane.f32.xlu0 %v669
        %v683 = vpop.xlane.xlu0 %682
        %684 = vadd.xlane.f32.xlu0 %v670
        %v685 = vpop.xlane.xlu0 %684
        %686 = vadd.xlane.f32.xlu0 %v671
        %v687 = vpop.xlane.xlu0 %686
        %v688 = vrot.slane %v673, 4
        %v689 = vmax.f32 %v673, %v688
        %v690 = vrot.slane %v689, 2
        %v691 = vmax.f32 %v689, %v690
        %v692 = vrot.slane %v691, 1
        %v693 = vmax.f32 %v691, %v692
        %v694 = vrot.slane %v675, 4
        %v695 = vmax.f32 %v675, %v694
        %v696 = vrot.slane %v695, 2
        %v697 = vmax.f32 %v695, %v696
        %v698 = vrot.slane %v697, 1
        %v699 = vmax.f32 %v697, %v698
        %v700 = vrot.slane %v677, 4
        %v701 = vmax.f32 %v677, %v700
        %v702 = vrot.slane %v701, 2
        %v703 = vmax.f32 %v701, %v702
        %v704 = vrot.slane %v703, 1
        %v705 = vmax.f32 %v703, %v704
        %v706 = vrot.slane %v679, 4
        %v707 = vmax.f32 %v679, %v706
        %v708 = vrot.slane %v707, 2
        %v709 = vmax.f32 %v707, %v708
        %v710 = vrot.slane %v709, 1
        %v711 = vmax.f32 %v709, %v710
        %v712 = vrot.slane %v681, 4
        %v713 = vmax.f32 %v681, %v712
        %v714 = vrot.slane %v713, 2
        %v715 = vmax.f32 %v713, %v714
        %v716 = vrot.slane %v715, 1
        %v717 = vmax.f32 %v715, %v716
        %v718 = vrot.slane %v683, 4
        %v719 = vmax.f32 %v683, %v718
        %v720 = vrot.slane %v719, 2
        %v721 = vmax.f32 %v719, %v720
        %v722 = vrot.slane %v721, 1
        %v723 = vmax.f32 %v721, %v722
        %v724 = vrot.slane %v685, 4
        %v725 = vmax.f32 %v685, %v724
        %v726 = vrot.slane %v725, 2
        %v727 = vmax.f32 %v725, %v726
        %v728 = vrot.slane %v727, 1
        %v729 = vmax.f32 %v727, %v728
        %v730 = vrot.slane %v687, 4
        %v731 = vmax.f32 %v687, %v730
        %v732 = vrot.slane %v731, 2
        %v733 = vmax.f32 %v731, %v732
        %v734 = vrot.slane %v733, 1
        %v735 = vmax.f32 %v733, %v734
        %v736 = vsub.f32 %v673, %v693
        %v737 = vsub.f32 %v675, %v699
        %v738 = vsub.f32 %v677, %v705
        %v739 = vsub.f32 %v679, %v711
        %v740 = vsub.f32 %v681, %v717
        %v741 = vsub.f32 %v683, %v723
        %v742 = vsub.f32 %v685, %v729
        %v743 = vsub.f32 %v687, %v735
        %v744 = vmul.f32 %v736, 1.442695
        %v745 = vpow.pop %v744
        %v746 = vmul.f32 %v737, 1.442695
        %v747 = vpow.pop %v746
        %v748 = vmul.f32 %v738, 1.442695
        %v749 = vpow.pop %v748
        %v750 = vmul.f32 %v739, 1.442695
        %v751 = vpow.pop %v750
        %v752 = vmul.f32 %v740, 1.442695
        %v753 = vpow.pop %v752
        %v754 = vmul.f32 %v741, 1.442695
        %v755 = vpow.pop %v754
        %v756 = vmul.f32 %v742, 1.442695
        %v757 = vpow.pop %v756
        %v758 = vmul.f32 %v743, 1.442695
        %v759 = vpow.pop %v758
        %v760 = vrot.slane %v745, 4
        %v761 = vadd.f32 %v745, %v760
        %v762 = vrot.slane %v761, 2
        %v763 = vadd.f32 %v761, %v762
        %v764 = vrot.slane %v763, 1
        %v765 = vadd.f32 %v763, %v764
        %v766 = vrot.slane %v747, 4
        %v767 = vadd.f32 %v747, %v766
        %v768 = vrot.slane %v767, 2
        %v769 = vadd.f32 %v767, %v768
        %v770 = vrot.slane %v769, 1
        %v771 = vadd.f32 %v769, %v770
        %v772 = vrot.slane %v749, 4
        %v773 = vadd.f32 %v749, %v772
        %v774 = vrot.slane %v773, 2
        %v775 = vadd.f32 %v773, %v774
        %v776 = vrot.slane %v775, 1
        %v777 = vadd.f32 %v775, %v776
        %v778 = vrot.slane %v751, 4
        %v779 = vadd.f32 %v751, %v778
        %v780 = vrot.slane %v779, 2
        %v781 = vadd.f32 %v779, %v780
        %v782 = vrot.slane %v781, 1
        %v783 = vadd.f32 %v781, %v782
        %v784 = vrot.slane %v753, 4
        %v785 = vadd.f32 %v753, %v784
        %v786 = vrot.slane %v785, 2
        %v787 = vadd.f32 %v785, %v786
        %v788 = vrot.slane %v787, 1
        %v789 = vadd.f32 %v787, %v788
        %v790 = vrot.slane %v755, 4
        %v791 = vadd.f32 %v755, %v790
        %v792 = vrot.slane %v791, 2
        %v793 = vadd.f32 %v791, %v792
        %v794 = vrot.slane %v793, 1
        %v795 = vadd.f32 %v793, %v794
        %v796 = vrot.slane %v757, 4
        %v797 = vadd.f32 %v757, %v796
        %v798 = vrot.slane %v797, 2
        %v799 = vadd.f32 %v797, %v798
        %v800 = vrot.slane %v799, 1
        %v801 = vadd.f32 %v799, %v800
        %v802 = vrot.slane %v759, 4
        %v803 = vadd.f32 %v759, %v802
        %v804 = vrot.slane %v803, 2
        %v805 = vadd.f32 %v803, %v804
        %v806 = vrot.slane %v805, 1
        %v807 = vadd.f32 %v805, %v806
        %v808 = vrcp.pop %v765
        %v809 = vrcp.pop %v771
        %v810 = vrcp.pop %v777
        %v811 = vrcp.pop %v783
        %v812 = vrcp.pop %v789
        %v813 = vrcp.pop %v795
        %v814 = vrcp.pop %v801
        %v815 = vrcp.pop %v807
        %v816 = vmul.f32 %v745, %v808
        %v817 = vmul.f32 %v747, %v809
        %v818 = vmul.f32 %v749, %v810
        %v819 = vmul.f32 %v751, %v811
        %v820 = vmul.f32 %v753, %v812
        %v821 = vmul.f32 %v755, %v813
        %v822 = vmul.f32 %v757, %v814
        %v823 = vmul.f32 %v759, %v815
        %v824 = vmul.f32 %v816, %v311
        %v825 = vmul.f32 %v817, %v312
        %v826 = vmul.f32 %v818, %v313
        %v827 = vmul.f32 %v819, %v314
        %v828 = vmul.f32 %v820, %v315
        %v829 = vmul.f32 %v821, %v316
        %v830 = vmul.f32 %v822, %v317
        %v831 = vmul.f32 %v823, %v318
        %v832 = vrot.slane %v824, 4
        %v833 = vadd.f32 %v824, %v832
        %v834 = vrot.slane %v833, 2
        %v835 = vadd.f32 %v833, %v834
        %v836 = vrot.slane %v835, 1
        %v837 = vadd.f32 %v835, %v836
        %v838 = vrot.slane %v825, 4
        %v839 = vadd.f32 %v825, %v838
        %v840 = vrot.slane %v839, 2
        %v841 = vadd.f32 %v839, %v840
        %v842 = vrot.slane %v841, 1
        %v843 = vadd.f32 %v841, %v842
        %v844 = vrot.slane %v826, 4
        %v845 = vadd.f32 %v826, %v844
        %v846 = vrot.slane %v845, 2
        %v847 = vadd.f32 %v845, %v846
        %v848 = vrot.slane %v847, 1
        %v849 = vadd.f32 %v847, %v848
        %v850 = vrot.slane %v827, 4
        %v851 = vadd.f32 %v827, %v850
        %v852 = vrot.slane %v851, 2
        %v853 = vadd.f32 %v851, %v852
        %v854 = vrot.slane %v853, 1
        %v855 = vadd.f32 %v853, %v854
        %v856 = vrot.slane %v828, 4
        %v857 = vadd.f32 %v828, %v856
        %v858 = vrot.slane %v857, 2
        %v859 = vadd.f32 %v857, %v858
        %v860 = vrot.slane %v859, 1
        %v861 = vadd.f32 %v859, %v860
        %v862 = vrot.slane %v829, 4
        %v863 = vadd.f32 %v829, %v862
        %v864 = vrot.slane %v863, 2
        %v865 = vadd.f32 %v863, %v864
        %v866 = vrot.slane %v865, 1
        %v867 = vadd.f32 %v865, %v866
        %v868 = vrot.slane %v830, 4
        %v869 = vadd.f32 %v830, %v868
        %v870 = vrot.slane %v869, 2
        %v871 = vadd.f32 %v869, %v870
        %v872 = vrot.slane %v871, 1
        %v873 = vadd.f32 %v871, %v872
        %v874 = vrot.slane %v831, 4
        %v875 = vadd.f32 %v831, %v874
        %v876 = vrot.slane %v875, 2
        %v877 = vadd.f32 %v875, %v876
        %v878 = vrot.slane %v877, 1
        %v879 = vadd.f32 %v877, %v878
        %v880 = vmul.f32 %v837, %v837
        %v881 = vmul.f32 %v843, %v843
        %v882 = vmul.f32 %v849, %v849
        %v883 = vmul.f32 %v855, %v855
        %v884 = vmul.f32 %v861, %v861
        %v885 = vmul.f32 %v867, %v867
        %v886 = vmul.f32 %v873, %v873
        %v887 = vmul.f32 %v879, %v879
        %888 = vadd.xlane.f32.xlu0 %v880
        %v889 = vpop.xlane.xlu0 %888
        %890 = vadd.xlane.f32.xlu0 %v881
        %v891 = vpop.xlane.xlu0 %890
        %892 = vadd.xlane.f32.xlu0 %v882
        %v893 = vpop.xlane.xlu0 %892
        %894 = vadd.xlane.f32.xlu0 %v883
        %v895 = vpop.xlane.xlu0 %894
        %896 = vadd.xlane.f32.xlu0 %v884
        %v897 = vpop.xlane.xlu0 %896
        %898 = vadd.xlane.f32.xlu0 %v885
        %v899 = vpop.xlane.xlu0 %898
        %900 = vadd.xlane.f32.xlu0 %v886
        %v901 = vpop.xlane.xlu0 %900
        %902 = vadd.xlane.f32.xlu0 %v887
        %v903 = vpop.xlane.xlu0 %902
        %v904 = vrsqrt.pop %v889
        %v905 = vmul.f32 %v889, %v904
        %vm906 = vcmp.eq.f32.partialorder %v889, inf
        %v907 = vsel %vm906, %v889, %v905
        %vm908 = vcmp.eq.f32.partialorder %v889, 0.0
        %v909 = vand.u32 %v889, 2147483648
        %v910 = vsel %vm908, %v909, %v907
        %v911 = vrsqrt.pop %v891
        %v912 = vmul.f32 %v891, %v911
        %vm913 = vcmp.eq.f32.partialorder %v891, inf
        %v914 = vsel %vm913, %v891, %v912
        %vm915 = vcmp.eq.f32.partialorder %v891, 0.0
        %v916 = vand.u32 %v891, 2147483648
        %v917 = vsel %vm915, %v916, %v914
        %v918 = vrsqrt.pop %v893
        %v919 = vmul.f32 %v893, %v918
        %vm920 = vcmp.eq.f32.partialorder %v893, inf
        %v921 = vsel %vm920, %v893, %v919
        %vm922 = vcmp.eq.f32.partialorder %v893, 0.0
        %v923 = vand.u32 %v893, 2147483648
        %v924 = vsel %vm922, %v923, %v921
        %v925 = vrsqrt.pop %v895
        %v926 = vmul.f32 %v895, %v925
        %vm927 = vcmp.eq.f32.partialorder %v895, inf
        %v928 = vsel %vm927, %v895, %v926
        %vm929 = vcmp.eq.f32.partialorder %v895, 0.0
        %v930 = vand.u32 %v895, 2147483648
        %v931 = vsel %vm929, %v930, %v928
        %v932 = vrsqrt.pop %v897
        %v933 = vmul.f32 %v897, %v932
        %vm934 = vcmp.eq.f32.partialorder %v897, inf
        %v935 = vsel %vm934, %v897, %v933
        %vm936 = vcmp.eq.f32.partialorder %v897, 0.0
        %v937 = vand.u32 %v897, 2147483648
        %v938 = vsel %vm936, %v937, %v935
        %v939 = vrsqrt.pop %v899
        %v940 = vmul.f32 %v899, %v939
        %vm941 = vcmp.eq.f32.partialorder %v899, inf
        %v942 = vsel %vm941, %v899, %v940
        %vm943 = vcmp.eq.f32.partialorder %v899, 0.0
        %v944 = vand.u32 %v899, 2147483648
        %v945 = vsel %vm943, %v944, %v942
        %v946 = vrsqrt.pop %v901
        %v947 = vmul.f32 %v901, %v946
        %vm948 = vcmp.eq.f32.partialorder %v901, inf
        %v949 = vsel %vm948, %v901, %v947
        %vm950 = vcmp.eq.f32.partialorder %v901, 0.0
        %v951 = vand.u32 %v901, 2147483648
        %v952 = vsel %vm950, %v951, %v949
        %v953 = vrsqrt.pop %v903
        %v954 = vmul.f32 %v903, %v953
        %vm955 = vcmp.eq.f32.partialorder %v903, inf
        %v956 = vsel %vm955, %v903, %v954
        %vm957 = vcmp.eq.f32.partialorder %v903, 0.0
        %v958 = vand.u32 %v903, 2147483648
        %v959 = vsel %vm957, %v958, %v956
        %v960 = vadd.f32 %v910, 1e-08
        %v961 = vadd.f32 %v917, 1e-08
        %v962 = vadd.f32 %v924, 1e-08
        %v963 = vadd.f32 %v931, 1e-08
        %v964 = vadd.f32 %v938, 1e-08
        %v965 = vadd.f32 %v945, 1e-08
        %v966 = vadd.f32 %v952, 1e-08
        %v967 = vadd.f32 %v959, 1e-08
        %v968 = vrcp.pop %v960
        %v969 = vmul.f32 %v837, %v968
        %v970 = vrcp.pop %v961
        %v971 = vmul.f32 %v843, %v970
        %v972 = vrcp.pop %v962
        %v973 = vmul.f32 %v849, %v972
        %v974 = vrcp.pop %v963
        %v975 = vmul.f32 %v855, %v974
        %v976 = vrcp.pop %v964
        %v977 = vmul.f32 %v861, %v976
        %v978 = vrcp.pop %v965
        %v979 = vmul.f32 %v867, %v978
        %v980 = vrcp.pop %v966
        %v981 = vmul.f32 %v873, %v980
        %v982 = vrcp.pop %v967
        %v983 = vmul.f32 %v879, %v982
        %v984 = vmul.f32 %v311, %v969
        %v985 = vmul.f32 %v312, %v971
        %v986 = vmul.f32 %v313, %v973
        %v987 = vmul.f32 %v314, %v975
        %v988 = vmul.f32 %v315, %v977
        %v989 = vmul.f32 %v316, %v979
        %v990 = vmul.f32 %v317, %v981
        %v991 = vmul.f32 %v318, %v983
        %992 = vadd.xlane.f32.xlu0 %v984
        %v993 = vpop.xlane.xlu0 %992
        %994 = vadd.xlane.f32.xlu0 %v985
        %v995 = vpop.xlane.xlu0 %994
        %996 = vadd.xlane.f32.xlu0 %v986
        %v997 = vpop.xlane.xlu0 %996
        %998 = vadd.xlane.f32.xlu0 %v987
        %v999 = vpop.xlane.xlu0 %998
        %1000 = vadd.xlane.f32.xlu0 %v988
        %v1001 = vpop.xlane.xlu0 %1000
        %1002 = vadd.xlane.f32.xlu0 %v989
        %v1003 = vpop.xlane.xlu0 %1002
        %1004 = vadd.xlane.f32.xlu0 %v990
        %v1005 = vpop.xlane.xlu0 %1004
        %1006 = vadd.xlane.f32.xlu0 %v991
        %v1007 = vpop.xlane.xlu0 %1006
        %v1008 = vmul.f32 %v993, 9.0
        %v1009 = vmul.f32 %v995, 9.0
        %v1010 = vmul.f32 %v997, 9.0
        %v1011 = vmul.f32 %v999, 9.0
        %v1012 = vmul.f32 %v1001, 9.0
        %v1013 = vmul.f32 %v1003, 9.0
        %v1014 = vmul.f32 %v1005, 9.0
        %v1015 = vmul.f32 %v1007, 9.0
        %v1016 = vrot.slane %v1008, 4
        %v1017 = vmax.f32 %v1008, %v1016
        %v1018 = vrot.slane %v1017, 2
        %v1019 = vmax.f32 %v1017, %v1018
        %v1020 = vrot.slane %v1019, 1
        %v1021 = vmax.f32 %v1019, %v1020
        %v1022 = vrot.slane %v1009, 4
        %v1023 = vmax.f32 %v1009, %v1022
        %v1024 = vrot.slane %v1023, 2
        %v1025 = vmax.f32 %v1023, %v1024
        %v1026 = vrot.slane %v1025, 1
        %v1027 = vmax.f32 %v1025, %v1026
        %v1028 = vrot.slane %v1010, 4
        %v1029 = vmax.f32 %v1010, %v1028
        %v1030 = vrot.slane %v1029, 2
        %v1031 = vmax.f32 %v1029, %v1030
        %v1032 = vrot.slane %v1031, 1
        %v1033 = vmax.f32 %v1031, %v1032
        %v1034 = vrot.slane %v1011, 4
        %v1035 = vmax.f32 %v1011, %v1034
        %v1036 = vrot.slane %v1035, 2
        %v1037 = vmax.f32 %v1035, %v1036
        %v1038 = vrot.slane %v1037, 1
        %v1039 = vmax.f32 %v1037, %v1038
        %v1040 = vrot.slane %v1012, 4
        %v1041 = vmax.f32 %v1012, %v1040
        %v1042 = vrot.slane %v1041, 2
        %v1043 = vmax.f32 %v1041, %v1042
        %v1044 = vrot.slane %v1043, 1
        %v1045 = vmax.f32 %v1043, %v1044
        %v1046 = vrot.slane %v1013, 4
        %v1047 = vmax.f32 %v1013, %v1046
        %v1048 = vrot.slane %v1047, 2
        %v1049 = vmax.f32 %v1047, %v1048
        %v1050 = vrot.slane %v1049, 1
        %v1051 = vmax.f32 %v1049, %v1050
        %v1052 = vrot.slane %v1014, 4
        %v1053 = vmax.f32 %v1014, %v1052
        %v1054 = vrot.slane %v1053, 2
        %v1055 = vmax.f32 %v1053, %v1054
        %v1056 = vrot.slane %v1055, 1
        %v1057 = vmax.f32 %v1055, %v1056
        %v1058 = vrot.slane %v1015, 4
        %v1059 = vmax.f32 %v1015, %v1058
        %v1060 = vrot.slane %v1059, 2
        %v1061 = vmax.f32 %v1059, %v1060
        %v1062 = vrot.slane %v1061, 1
        %v1063 = vmax.f32 %v1061, %v1062
        %v1064 = vsub.f32 %v1008, %v1021
        %v1065 = vsub.f32 %v1009, %v1027
        %v1066 = vsub.f32 %v1010, %v1033
        %v1067 = vsub.f32 %v1011, %v1039
        %v1068 = vsub.f32 %v1012, %v1045
        %v1069 = vsub.f32 %v1013, %v1051
        %v1070 = vsub.f32 %v1014, %v1057
        %v1071 = vsub.f32 %v1015, %v1063
        %v1072 = vmul.f32 %v1064, 1.442695
        %v1073 = vpow.pop %v1072
        %v1074 = vmul.f32 %v1065, 1.442695
        %v1075 = vpow.pop %v1074
        %v1076 = vmul.f32 %v1066, 1.442695
        %v1077 = vpow.pop %v1076
        %v1078 = vmul.f32 %v1067, 1.442695
        %v1079 = vpow.pop %v1078
        %v1080 = vmul.f32 %v1068, 1.442695
        %v1081 = vpow.pop %v1080
        %v1082 = vmul.f32 %v1069, 1.442695
        %v1083 = vpow.pop %v1082
        %v1084 = vmul.f32 %v1070, 1.442695
        %v1085 = vpow.pop %v1084
        %v1086 = vmul.f32 %v1071, 1.442695
        %v1087 = vpow.pop %v1086
        %v1088 = vrot.slane %v1073, 4
        %v1089 = vadd.f32 %v1073, %v1088
        %v1090 = vrot.slane %v1089, 2
        %v1091 = vadd.f32 %v1089, %v1090
        %v1092 = vrot.slane %v1091, 1
        %v1093 = vadd.f32 %v1091, %v1092
        %v1094 = vrot.slane %v1075, 4
        %v1095 = vadd.f32 %v1075, %v1094
        %v1096 = vrot.slane %v1095, 2
        %v1097 = vadd.f32 %v1095, %v1096
        %v1098 = vrot.slane %v1097, 1
        %v1099 = vadd.f32 %v1097, %v1098
        %v1100 = vrot.slane %v1077, 4
        %v1101 = vadd.f32 %v1077, %v1100
        %v1102 = vrot.slane %v1101, 2
        %v1103 = vadd.f32 %v1101, %v1102
        %v1104 = vrot.slane %v1103, 1
        %v1105 = vadd.f32 %v1103, %v1104
        %v1106 = vrot.slane %v1079, 4
        %v1107 = vadd.f32 %v1079, %v1106
        %v1108 = vrot.slane %v1107, 2
        %v1109 = vadd.f32 %v1107, %v1108
        %v1110 = vrot.slane %v1109, 1
        %v1111 = vadd.f32 %v1109, %v1110
        %v1112 = vrot.slane %v1081, 4
        %v1113 = vadd.f32 %v1081, %v1112
        %v1114 = vrot.slane %v1113, 2
        %v1115 = vadd.f32 %v1113, %v1114
        %v1116 = vrot.slane %v1115, 1
        %v1117 = vadd.f32 %v1115, %v1116
        %v1118 = vrot.slane %v1083, 4
        %v1119 = vadd.f32 %v1083, %v1118
        %v1120 = vrot.slane %v1119, 2
        %v1121 = vadd.f32 %v1119, %v1120
        %v1122 = vrot.slane %v1121, 1
        %v1123 = vadd.f32 %v1121, %v1122
        %v1124 = vrot.slane %v1085, 4
        %v1125 = vadd.f32 %v1085, %v1124
        %v1126 = vrot.slane %v1125, 2
        %v1127 = vadd.f32 %v1125, %v1126
        %v1128 = vrot.slane %v1127, 1
        %v1129 = vadd.f32 %v1127, %v1128
        %v1130 = vrot.slane %v1087, 4
        %v1131 = vadd.f32 %v1087, %v1130
        %v1132 = vrot.slane %v1131, 2
        %v1133 = vadd.f32 %v1131, %v1132
        %v1134 = vrot.slane %v1133, 1
        %v1135 = vadd.f32 %v1133, %v1134
        %v1136 = vrcp.pop %v1093
        %v1137 = vrcp.pop %v1099
        %v1138 = vrcp.pop %v1105
        %v1139 = vrcp.pop %v1111
        %v1140 = vrcp.pop %v1117
        %v1141 = vrcp.pop %v1123
        %v1142 = vrcp.pop %v1129
        %v1143 = vrcp.pop %v1135
        %v1144 = vmul.f32 %v1073, %v1136
        %v1145 = vmul.f32 %v1075, %v1137
        %v1146 = vmul.f32 %v1077, %v1138
        %v1147 = vmul.f32 %v1079, %v1139
        %v1148 = vmul.f32 %v1081, %v1140
        %v1149 = vmul.f32 %v1083, %v1141
        %v1150 = vmul.f32 %v1085, %v1142
        %v1151 = vmul.f32 %v1087, %v1143
        %v1152 = vmul.f32 %v1144, %v1144
        %v1153 = vmul.f32 %v1145, %v1145
        %v1154 = vmul.f32 %v1146, %v1146
        %v1155 = vmul.f32 %v1147, %v1147
        %v1156 = vmul.f32 %v1148, %v1148
        %v1157 = vmul.f32 %v1149, %v1149
        %v1158 = vmul.f32 %v1150, %v1150
        %v1159 = vmul.f32 %v1151, %v1151
        %v1160 = vrot.slane %v1152, 4
        %v1161 = vadd.f32 %v1152, %v1160
        %v1162 = vrot.slane %v1161, 2
        %v1163 = vadd.f32 %v1161, %v1162
        %v1164 = vrot.slane %v1163, 1
        %v1165 = vadd.f32 %v1163, %v1164
        %v1166 = vrot.slane %v1153, 4
        %v1167 = vadd.f32 %v1153, %v1166
        %v1168 = vrot.slane %v1167, 2
        %v1169 = vadd.f32 %v1167, %v1168
        %v1170 = vrot.slane %v1169, 1
        %v1171 = vadd.f32 %v1169, %v1170
        %v1172 = vrot.slane %v1154, 4
        %v1173 = vadd.f32 %v1154, %v1172
        %v1174 = vrot.slane %v1173, 2
        %v1175 = vadd.f32 %v1173, %v1174
        %v1176 = vrot.slane %v1175, 1
        %v1177 = vadd.f32 %v1175, %v1176
        %v1178 = vrot.slane %v1155, 4
        %v1179 = vadd.f32 %v1155, %v1178
        %v1180 = vrot.slane %v1179, 2
        %v1181 = vadd.f32 %v1179, %v1180
        %v1182 = vrot.slane %v1181, 1
        %v1183 = vadd.f32 %v1181, %v1182
        %v1184 = vrot.slane %v1156, 4
        %v1185 = vadd.f32 %v1156, %v1184
        %v1186 = vrot.slane %v1185, 2
        %v1187 = vadd.f32 %v1185, %v1186
        %v1188 = vrot.slane %v1187, 1
        %v1189 = vadd.f32 %v1187, %v1188
        %v1190 = vrot.slane %v1157, 4
        %v1191 = vadd.f32 %v1157, %v1190
        %v1192 = vrot.slane %v1191, 2
        %v1193 = vadd.f32 %v1191, %v1192
        %v1194 = vrot.slane %v1193, 1
        %v1195 = vadd.f32 %v1193, %v1194
        %v1196 = vrot.slane %v1158, 4
        %v1197 = vadd.f32 %v1158, %v1196
        %v1198 = vrot.slane %v1197, 2
        %v1199 = vadd.f32 %v1197, %v1198
        %v1200 = vrot.slane %v1199, 1
        %v1201 = vadd.f32 %v1199, %v1200
        %v1202 = vrot.slane %v1159, 4
        %v1203 = vadd.f32 %v1159, %v1202
        %v1204 = vrot.slane %v1203, 2
        %v1205 = vadd.f32 %v1203, %v1204
        %v1206 = vrot.slane %v1205, 1
        %v1207 = vadd.f32 %v1205, %v1206
        %v1208 = vrsqrt.pop %v1165
        %v1209 = vmul.f32 %v1165, %v1208
        %vm1210 = vcmp.eq.f32.partialorder %v1165, inf
        %v1211 = vsel %vm1210, %v1165, %v1209
        %vm1212 = vcmp.eq.f32.partialorder %v1165, 0.0
        %v1213 = vand.u32 %v1165, 2147483648
        %v1214 = vsel %vm1212, %v1213, %v1211
        %v1215 = vrsqrt.pop %v1171
        %v1216 = vmul.f32 %v1171, %v1215
        %vm1217 = vcmp.eq.f32.partialorder %v1171, inf
        %v1218 = vsel %vm1217, %v1171, %v1216
        %vm1219 = vcmp.eq.f32.partialorder %v1171, 0.0
        %v1220 = vand.u32 %v1171, 2147483648
        %v1221 = vsel %vm1219, %v1220, %v1218
        %v1222 = vrsqrt.pop %v1177
        %v1223 = vmul.f32 %v1177, %v1222
        %vm1224 = vcmp.eq.f32.partialorder %v1177, inf
        %v1225 = vsel %vm1224, %v1177, %v1223
        %vm1226 = vcmp.eq.f32.partialorder %v1177, 0.0
        %v1227 = vand.u32 %v1177, 2147483648
        %v1228 = vsel %vm1226, %v1227, %v1225
        %v1229 = vrsqrt.pop %v1183
        %v1230 = vmul.f32 %v1183, %v1229
        %vm1231 = vcmp.eq.f32.partialorder %v1183, inf
        %v1232 = vsel %vm1231, %v1183, %v1230
        %vm1233 = vcmp.eq.f32.partialorder %v1183, 0.0
        %v1234 = vand.u32 %v1183, 2147483648
        %v1235 = vsel %vm1233, %v1234, %v1232
        %v1236 = vrsqrt.pop %v1189
        %v1237 = vmul.f32 %v1189, %v1236
        %vm1238 = vcmp.eq.f32.partialorder %v1189, inf
        %v1239 = vsel %vm1238, %v1189, %v1237
        %vm1240 = vcmp.eq.f32.partialorder %v1189, 0.0
        %v1241 = vand.u32 %v1189, 2147483648
        %v1242 = vsel %vm1240, %v1241, %v1239
        %v1243 = vrsqrt.pop %v1195
        %v1244 = vmul.f32 %v1195, %v1243
        %vm1245 = vcmp.eq.f32.partialorder %v1195, inf
        %v1246 = vsel %vm1245, %v1195, %v1244
        %vm1247 = vcmp.eq.f32.partialorder %v1195, 0.0
        %v1248 = vand.u32 %v1195, 2147483648
        %v1249 = vsel %vm1247, %v1248, %v1246
        %v1250 = vrsqrt.pop %v1201
        %v1251 = vmul.f32 %v1201, %v1250
        %vm1252 = vcmp.eq.f32.partialorder %v1201, inf
        %v1253 = vsel %vm1252, %v1201, %v1251
        %vm1254 = vcmp.eq.f32.partialorder %v1201, 0.0
        %v1255 = vand.u32 %v1201, 2147483648
        %v1256 = vsel %vm1254, %v1255, %v1253
        %v1257 = vrsqrt.pop %v1207
        %v1258 = vmul.f32 %v1207, %v1257
        %vm1259 = vcmp.eq.f32.partialorder %v1207, inf
        %v1260 = vsel %vm1259, %v1207, %v1258
        %vm1261 = vcmp.eq.f32.partialorder %v1207, 0.0
        %v1262 = vand.u32 %v1207, 2147483648
        %v1263 = vsel %vm1261, %v1262, %v1260
        %v1264 = vadd.f32 %v1214, 1e-08
        %v1265 = vadd.f32 %v1221, 1e-08
        %v1266 = vadd.f32 %v1228, 1e-08
        %v1267 = vadd.f32 %v1235, 1e-08
        %v1268 = vadd.f32 %v1242, 1e-08
        %v1269 = vadd.f32 %v1249, 1e-08
        %v1270 = vadd.f32 %v1256, 1e-08
        %v1271 = vadd.f32 %v1263, 1e-08
        %v1272 = vrcp.pop %v1264
        %v1273 = vrcp.pop %v1265
        %v1274 = vrcp.pop %v1266
        %v1275 = vrcp.pop %v1267
        %v1276 = vrcp.pop %v1268
        %v1277 = vrcp.pop %v1269
        %v1278 = vrcp.pop %v1270
        %v1279 = vrcp.pop %v1271
        %v1280 = vmul.f32 %v1144, %v1272
        %v1281 = vmul.f32 %v1145, %v1273
        %v1282 = vmul.f32 %v1146, %v1274
        %v1283 = vmul.f32 %v1147, %v1275
        %v1284 = vmul.f32 %v1148, %v1276
        %v1285 = vmul.f32 %v1149, %v1277
        %v1286 = vmul.f32 %v1150, %v1278
        %v1287 = vmul.f32 %v1151, %v1279
        %v1288 = vmul.f32 %v1280, %v969
        %v1289 = vmul.f32 %v1281, %v971
        %v1290 = vmul.f32 %v1282, %v973
        %v1291 = vmul.f32 %v1283, %v975
        %v1292 = vmul.f32 %v1284, %v977
        %v1293 = vmul.f32 %v1285, %v979
        %v1294 = vmul.f32 %v1286, %v981
        %v1295 = vmul.f32 %v1287, %v983
        %v1296 = vadd.f32 %v311, %v1288
        %v1297 = vadd.f32 %v312, %v1289
        %v1298 = vadd.f32 %v313, %v1290
        %v1299 = vadd.f32 %v314, %v1291
        %v1300 = vadd.f32 %v315, %v1292
        %v1301 = vadd.f32 %v316, %v1293
        %v1302 = vadd.f32 %v317, %v1294
        %v1303 = vadd.f32 %v318, %v1295
        %1304 = vst [vmem:[%s308] sm:$0xff] %v1296
        %1305 = vst [vmem:[%s308 + $0x8] sm:$0xff] %v1297
        %1306 = vst [vmem:[%s308 + $0x10] sm:$0xff] %v1298
        %1307 = vst [vmem:[%s308 + $0x18] sm:$0xff] %v1299
        %1308 = vst [vmem:[%s308 + $0x20] sm:$0xff] %v1300
        %1309 = vst [vmem:[%s308 + $0x28] sm:$0xff] %v1301
        %1310 = vst [vmem:[%s308 + $0x30] sm:$0xff] %v1302
        %1311 = vst [vmem:[%s308 + $0x38] sm:$0xff] %v1303
        %s1312 = sand.u32 %s149, 1
        %s1313 = scalar_lea.sflag [#allocation4], %s1312
        %s1314 = sand.u32 %s149, 1
        %s1315 = smul.addr %s1314, 64
        %s1316 = scalar_lea.vmem [#allocation10], %s1315
        // Predicated region
        $region57: #{tpu_custom_call.1} parent=39 // pred_check
          %p1317 = pneg %p159
        $region58: #{tpu_custom_call.1} parent=39 // pred_check_branch
          %1319 = sbr.rel (%p1317) target = $region60
        $region59: #{tpu_custom_call.1} parent=39 // pred_region
          %s1320 = smul.u32 8, %s26
          %s1322 = ssub.s32 1024, 1024
          %1323 = vsyncadd %s1313, %s1322
          %s1324 = smul.addr %s1320, 128
          %s1325 = scalar_lea.hbm %s5, %s1324
          %s1326 = sshll.u32 %s1316, 4
          %s1327 = int_to_ptr.vmem [resolvable:$true] %s1326
          %1332 = dma.vmem_to_hbm [thread:$0]  %s1327, 1024, %s1325, %s1313, 128, 128, 8
        $region60: #{tpu_custom_call.1} parent=39 // pred_fallthru
          _
      $region40: #{tpu_custom_call.1} parent=5 // pred_fallthru
        _
      %p1333 = scmp.le.s32.totalorder 2, %s21
      // Predicated region
      $region61: #{tpu_custom_call.1} parent=5 // pred_check
        %p1334 = pneg %p1333
      $region62: #{tpu_custom_call.1} parent=5 // pred_check_branch
        %1336 = sbr.rel (%p1334) target = $region64
      $region63: #{tpu_custom_call.1} parent=5 // pred_region
        %s1337 = ssub.s32 %s21, 2
        // Predicated region
        $region65: #{tpu_custom_call.1} parent=63 // pred_check
          %p1338 = pneg %p165
        $region66: #{tpu_custom_call.1} parent=63 // pred_check_branch
          %1340 = sbr.rel (%p1338) target = $region68
        $region67: #{tpu_custom_call.1} parent=63 // pred_region
          %s1341 = sand.u32 %s150, 1
          %s1342 = scalar_lea.sflag [#allocation4], %s1341
          %s1343 = sand.u32 %s150, 1
          %s1344 = smul.addr %s1343, 64
          %s1345 = scalar_lea.vmem [#allocation10], %s1344
          %1346 = dma.done %s1342, 1024
        $region68: #{tpu_custom_call.1} parent=63 // pred_fallthru
          _
      $region64: #{tpu_custom_call.1} parent=5 // pred_fallthru
        _
    $region6: #{tpu_custom_call.1} parent=1 // loop_footer
      %s25 = sadd.s32 1, %s21
    $region7: #{tpu_custom_call.1} parent=1 // loop_footer_branch
      %20 = sbr.rel target = $region3
    $region8: #{tpu_custom_call.1} parent=1 // loop_exit
      _
    %1347 = vsyncpa [#allocation3], 1
    %s1348 = scalar_lea.sflag [#allocation3], 1
    %1349 = vsyncpa %s1348, 1
    %1350 = vsyncpa [#allocation6], 1
    %s1351 = scalar_lea.sflag [#allocation6], 1
    %1352 = vsyncpa %s1351, 1
    %1353 = vsyncpa [#allocation9], 1
    %1354 = vsyncpa [#allocation4], 1
    %s1355 = scalar_lea.sflag [#allocation4], 1
    %1356 = vsyncpa %s1355, 1

</llo_original>
